<compile_context>
chip_gen: v5e
topology: v5e:2x2
jax: 0.10.0
libtpu: 0.0.40
codegen_flags: <defaults>
</compile_context>

<pallas_src>
import functools
import math

import jax
import jax.numpy as jnp
from jax import lax
from jax.experimental import pallas as pl
from jax.experimental.pallas import tpu as pltpu

VMEM = pltpu.MemorySpace.VMEM
_LANE = 128
_EW_TILE_ROWS = 4096          # ~1-2 MiB per elementwise block


def _vspec():
    return pl.BlockSpec(memory_space=VMEM)


def _ceil_to(x, m):
    return (x + m - 1) // m * m


def _vmem_budget_bytes():
    # v7x: 64 MiB per TensorCore; v5e/v6e: 128 MiB.  Derive, don't hard-code.
    try:
        return int(pltpu.get_tpu_info().vmem_capacity_bytes)
    except Exception:
        return 64 * 1024 * 1024


def _pad_dim(x, axis, to):
    pad = to - x.shape[axis]
    if pad == 0:
        return x
    widths = [(0, 0)] * x.ndim
    widths[axis] = (0, pad)
    return jnp.pad(x, widths)


def _pick_tile(dim, cap, align):
    """Full-extent block when the dim is small (always legal, no padding);
    otherwise an aligned tile that minimizes ragged-edge padding."""
    if dim <= cap:
        return dim
    nblk = -(-dim // cap)
    return _ceil_to(-(-dim // nblk), align)


# ----------------------------------------------------------------------------
# Tiled matmul with fused bias + activation epilogue (bf16 in, f32 accumulate)
# ----------------------------------------------------------------------------
def _mm_kernel(a_ref, b_ref, bias_ref, o_ref, acc_ref, *, act):
    @pl.when(pl.program_id(2) == 0)
    def _init():
        acc_ref[...] = jnp.zeros_like(acc_ref)

    acc_ref[...] += jnp.dot(a_ref[...], b_ref[...],
                            preferred_element_type=jnp.float32)

    @pl.when(pl.program_id(2) == pl.num_programs(2) - 1)
    def _finalize():
        y = acc_ref[...] + bias_ref[...]
        if act == "relu":
            y = jnp.maximum(y, 0.0)
        elif act == "gelu":
            y = jax.nn.gelu(y, approximate=True)
        o_ref[...] = y.astype(o_ref.dtype)


def matmul_bias_act(a, b, bias=None, act="none", out_dtype=jnp.bfloat16):
    """(M,K)@(K,N) + bias + activation.  bf16 MXU inputs, f32 VMEM accumulator."""
    M, K = a.shape
    K2, N = b.shape
    assert K == K2
    a = a.astype(jnp.bfloat16)
    b = b.astype(jnp.bfloat16)
    if bias is None:
        bias = jnp.zeros((N,), jnp.float32)
    bias = bias.astype(jnp.float32).reshape(1, N)

    tm = _pick_tile(M, 512, 16)       # bf16 packs 2 rows/sublane -> 16 alignment
    tn = _pick_tile(N, 1024, 128)
    tk = _pick_tile(K, 1024, 128)

    out_bytes = jnp.dtype(out_dtype).itemsize

    def _foot(tm_, tn_, tk_):
        return (2 * (tm_ * tk_ + tk_ * tn_) * 2      # double-buffered bf16 A, B
                + 2 * tm_ * tn_ * out_bytes          # double-buffered output
                + tm_ * tn_ * 4)                     # f32 accumulator

    budget = min(_vmem_budget_bytes() // 2, 32 << 20)
    while _foot(tm, tn, tk) > budget and tk > 128:
        tk = max(128, _ceil_to(tk // 2, 128))
    while _foot(tm, tn, tk) > budget and tn > 128:
        tn = max(128, _ceil_to(tn // 2, 128))
    while _foot(tm, tn, tk) > budget and tm > 16:
        tm = max(16, _ceil_to(tm // 2, 16))

    Mp, Np, Kp = _ceil_to(M, tm), _ceil_to(N, tn), _ceil_to(K, tk)
    a_p = _pad_dim(_pad_dim(a, 0, Mp), 1, Kp)
    b_p = _pad_dim(_pad_dim(b, 0, Kp), 1, Np)
    bias_p = _pad_dim(bias, 1, Np)
    grid = (Mp // tm, Np // tn, Kp // tk)

    vmem_limit = int(min(_vmem_budget_bytes() * 15 // 16,
                         max(32 << 20, _foot(tm, tn, tk) + (16 << 20))))
    out = pl.pallas_call(
        functools.partial(_mm_kernel, act=act),
        out_shape=jax.ShapeDtypeStruct((Mp, Np), out_dtype),
        grid=grid,
        in_specs=[
            pl.BlockSpec((tm, tk), lambda i, j, k: (i, k)),
            pl.BlockSpec((tk, tn), lambda i, j, k: (k, j)),
            pl.BlockSpec((1, tn), lambda i, j, k: (0, j)),
        ],
        out_specs=pl.BlockSpec((tm, tn), lambda i, j, k: (i, j)),
        scratch_shapes=[pltpu.VMEM((tm, tn), jnp.float32)],
        compiler_params=pltpu.CompilerParams(
            dimension_semantics=("parallel", "parallel", "arbitrary"),
            vmem_limit_bytes=vmem_limit),
    )(a_p, b_p, bias_p)
    if Mp != M or Np != N:
        out = out[:M, :N]
    return out


# ----------------------------------------------------------------------------
# Flash-style fused attention (online softmax; 1/sqrt(D) folded into q at init)
# ----------------------------------------------------------------------------
def _attn_kernel(q_ref, k_ref, v_ref, o_ref, m_sc, l_sc, acc_sc,
                 *, nk_real, tkv, masked):
    kv = pl.program_id(1)

    @pl.when(kv == 0)
    def _init():
        m_sc[...] = jnp.full_like(m_sc, -1e30)
        l_sc[...] = jnp.zeros_like(l_sc)
        acc_sc[...] = jnp.zeros_like(acc_sc)

    s = lax.dot_general(q_ref[...], k_ref[...], (((1,), (1,)), ((), ())),
                        preferred_element_type=jnp.float32)
    if masked:                                        # only compiled when Nk is padded
        col = lax.broadcasted_iota(jnp.int32, s.shape, 1) + kv * tkv
        s = jnp.where(col < nk_real, s, -1e30)

    m_new = jnp.maximum(m_sc[...], jnp.max(s, axis=-1, keepdims=True))
    alpha = jnp.exp(m_sc[...] - m_new)
    p = jnp.exp(s - m_new)
    l_sc[...] = alpha * l_sc[...] + jnp.sum(p, axis=-1, keepdims=True)
    acc_sc[...] = alpha * acc_sc[...] + jnp.dot(
        p.astype(v_ref.dtype), v_ref[...], preferred_element_type=jnp.float32)
    m_sc[...] = m_new

    @pl.when(kv == pl.num_programs(1) - 1)
    def _finalize():
        o_ref[...] = (acc_sc[...] * pl.reciprocal(l_sc[...], approx=True)
                      ).astype(o_ref.dtype)


def attention(q, k, v, out_dtype=jnp.bfloat16):
    Nq, D = q.shape
    Nk, _ = k.shape
    q = q.astype(jnp.bfloat16)
    k = k.astype(jnp.bfloat16)
    v = v.astype(jnp.bfloat16)
    tq = _pick_tile(Nq, 512, 16)
    tkv = _pick_tile(Nk, 1024, 16)
    Nq_p, Nk_p = _ceil_to(Nq, tq), _ceil_to(Nk, tkv)
    q_p = _pad_dim(q, 0, Nq_p)
    k_p = _pad_dim(k, 0, Nk_p)
    v_p = _pad_dim(v, 0, Nk_p)
    grid = (Nq_p // tq, Nk_p // tkv)

    out = pl.pallas_call(
        functools.partial(_attn_kernel, nk_real=Nk, tkv=tkv, masked=Nk_p != Nk),
        out_shape=jax.ShapeDtypeStruct((Nq_p, D), out_dtype),
        grid=grid,
        in_specs=[pl.BlockSpec((tq, D), lambda i, j: (i, 0)),
                  pl.BlockSpec((tkv, D), lambda i, j: (j, 0)),
                  pl.BlockSpec((tkv, D), lambda i, j: (j, 0))],
        out_specs=pl.BlockSpec((tq, D), lambda i, j: (i, 0)),
        scratch_shapes=[pltpu.VMEM((tq, 1), jnp.float32),
                        pltpu.VMEM((tq, 1), jnp.float32),
                        pltpu.VMEM((tq, D), jnp.float32)],
        compiler_params=pltpu.CompilerParams(
            dimension_semantics=("parallel", "arbitrary")),
    )(q_p, k_p, v_p)
    return out[:Nq] if Nq_p != Nq else out


# ----------------------------------------------------------------------------
# Lane-dense elementwise kernels: flattened to (rows, 128), row-tiled grid
# ----------------------------------------------------------------------------
def _flatten_lane(arrays, dtype):
    size = arrays[0].size
    rows_needed = max(1, -(-size // _LANE))
    if rows_needed <= _EW_TILE_ROWS:
        tr = _ceil_to(rows_needed, 8)
        rows = tr
    else:
        tr = _EW_TILE_ROWS
        rows = _ceil_to(rows_needed, tr)
    padded = rows * _LANE
    outs = []
    for a in arrays:
        f = a.reshape(-1).astype(dtype)
        if padded != size:
            f = jnp.pad(f, (0, padded - size))
        outs.append(f.reshape(rows, _LANE))
    return outs, rows, tr, size


def _unflatten_lane(y, shape, size):
    return y.reshape(-1)[:size].reshape(shape)


def _add_act_kernel(a_ref, b_ref, o_ref, *, act):
    y = a_ref[...] + b_ref[...]
    if act == "relu":
        y = jnp.maximum(y, 0.0)
    o_ref[...] = y.astype(o_ref.dtype)


def add_act(a, b, act="none", dtype=jnp.bfloat16):
    (a2, b2), rows, tr, size = _flatten_lane([a, b], dtype)
    spec = pl.BlockSpec((tr, _LANE), lambda i: (i, 0))
    y = pl.pallas_call(
        functools.partial(_add_act_kernel, act=act),
        out_shape=jax.ShapeDtypeStruct((rows, _LANE), dtype),
        grid=(rows // tr,),
        in_specs=[spec, spec], out_specs=spec,
        compiler_params=pltpu.CompilerParams(dimension_semantics=("parallel",)),
    )(a2, b2)
    return _unflatten_lane(y, a.shape, size)


def _gate_kernel(a_ref, c_ref, alpha_ref, o_ref):
    g = jax.nn.sigmoid(alpha_ref[...])                # (1,1) broadcasts
    y = g * a_ref[...].astype(jnp.float32) + (1.0 - g) * c_ref[...].astype(jnp.float32)
    o_ref[...] = y.astype(o_ref.dtype)


def gate_fuse(sam, cnn, alpha, dtype=jnp.bfloat16):
    (a2, c2), rows, tr, size = _flatten_lane([sam, cnn], dtype)
    spec = pl.BlockSpec((tr, _LANE), lambda i: (i, 0))
    y = pl.pallas_call(
        _gate_kernel,
        out_shape=jax.ShapeDtypeStruct((rows, _LANE), dtype),
        grid=(rows // tr,),
        in_specs=[spec, spec, pl.BlockSpec((1, 1), lambda i: (0, 0))],
        out_specs=spec,
        compiler_params=pltpu.CompilerParams(dimension_semantics=("parallel",)),
    )(a2, c2, jnp.asarray(alpha, jnp.float32).reshape(1, 1))
    return _unflatten_lane(y, sam.shape, size)


def _src_kpe_kernel(e_ref, d_ref, p_ref, src_ref, kpe_ref):
    s = e_ref[...] + d_ref[...]
    src_ref[...] = s.astype(src_ref.dtype)
    kpe_ref[...] = (s + p_ref[...]).astype(kpe_ref.dtype)


def src_kpe(emb2d, dense2d, pe2d, dtype=jnp.bfloat16):
    (e, d, pe), rows, tr, size = _flatten_lane([emb2d, dense2d, pe2d], dtype)
    spec = pl.BlockSpec((tr, _LANE), lambda i: (i, 0))
    src, kpe = pl.pallas_call(
        _src_kpe_kernel,
        out_shape=(jax.ShapeDtypeStruct((rows, _LANE), dtype),) * 2,
        grid=(rows // tr,),
        in_specs=[spec] * 3,
        out_specs=(spec, spec),
        compiler_params=pltpu.CompilerParams(dimension_semantics=("parallel",)),
    )(e, d, pe)
    return (_unflatten_lane(src, emb2d.shape, size),
            _unflatten_lane(kpe, emb2d.shape, size))


# ----------------------------------------------------------------------------
# MaxPool 3x3 stride 2 pad 1: single read of the padded map, window max in-kernel
# ----------------------------------------------------------------------------
def _maxpool_kernel(xea_ref, xeb_ref, xoa_ref, xob_ref, o_ref, *, wo):
    ve = jnp.maximum(jnp.maximum(xea_ref[0, 0], xea_ref[0, 1]), xeb_ref[0, 0])
    vo = jnp.maximum(jnp.maximum(xoa_ref[0, 0], xoa_ref[0, 1]), xob_ref[0, 0])
    o_ref[0, 0] = jnp.maximum(jnp.maximum(ve[:wo, :], vo[:wo, :]), ve[1:wo + 1, :])


def maxpool3x3s2(x):
    """3x3/s2/p1 max-pool.  The padded map is split once into even/odd column
    phases (one XLA pass), then a (batch, output-row) grid does the full window
    max in-kernel -- no 9x HBM window duplication, no whole-map VMEM residency."""
    B, H, W, C = x.shape
    Ho = (H + 2 - 3) // 2 + 1
    Wo = (W + 2 - 3) // 2 + 1
    Hp, Wp = 2 * Ho + 2, 2 * Wo + 2
    xp = jnp.pad(x, ((0, 0), (1, Hp - H - 1), (1, Wp - W - 1), (0, 0)),
                 constant_values=-1e30)
    xe = xp[:, :, 0::2, :]                   # even padded columns  (B, Hp, Wo+1, C)
    xo = xp[:, :, 1::2, :]                   # odd padded columns   (B, Hp, Wo+1, C)
    We = xe.shape[2]
    row_a = lambda b, r: (b, r, 0, 0)        # padded rows 2r, 2r+1
    row_b = lambda b, r: (b, r + 1, 0, 0)    # padded rows 2r+2, 2r+3 (halo)
    return pl.pallas_call(
        functools.partial(_maxpool_kernel, wo=Wo),
        out_shape=jax.ShapeDtypeStruct((B, Ho, Wo, C), x.dtype),
        grid=(B, Ho),
        in_specs=[pl.BlockSpec((1, 2, We, C), row_a),
                  pl.BlockSpec((1, 2, We, C), row_b),
                  pl.BlockSpec((1, 2, We, C), row_a),
                  pl.BlockSpec((1, 2, We, C), row_b)],
        out_specs=pl.BlockSpec((1, 1, Wo, C), lambda b, r: (b, r, 0, 0)),
        compiler_params=pltpu.CompilerParams(
            dimension_semantics=("parallel", "parallel")),
    )(xe, xe, xo, xo)


# ----------------------------------------------------------------------------
# LayerNorm kernels (row-tiled grid; channel dim is the full lane extent)
# ----------------------------------------------------------------------------
def _ln_tile(M, C):
    cap = max(8, min(1024, (4 << 20) // (4 * C) // 8 * 8))
    return M if M <= cap else cap


def _ln_kernel(x_ref, g_ref, b_ref, o_ref, *, eps, act):
    x = x_ref[...].astype(jnp.float32)
    mu = jnp.mean(x, axis=-1, keepdims=True)
    var = jnp.mean(jnp.square(x - mu), axis=-1, keepdims=True)
    y = (x - mu) * lax.rsqrt(var + eps) * g_ref[...] + b_ref[...]
    if act == "gelu":
        y = jax.nn.gelu(y, approximate=True)
    o_ref[...] = y.astype(o_ref.dtype)


def layernorm(x2d, g, b, act="none", eps=1e-6, out_dtype=jnp.bfloat16):
    M, C = x2d.shape
    tm = _ln_tile(M, C)
    Mp = _ceil_to(M, tm)
    xp = _pad_dim(x2d, 0, Mp)
    row = pl.BlockSpec((tm, C), lambda i: (i, 0))
    vec = pl.BlockSpec((1, C), lambda i: (0, 0))
    out = pl.pallas_call(
        functools.partial(_ln_kernel, eps=eps, act=act),
        out_shape=jax.ShapeDtypeStruct((Mp, C), out_dtype),
        grid=(Mp // tm,),
        in_specs=[row, vec, vec],
        out_specs=row,
        compiler_params=pltpu.CompilerParams(dimension_semantics=("parallel",)),
    )(xp, g.reshape(1, C).astype(jnp.float32), b.reshape(1, C).astype(jnp.float32))
    return out if Mp == M else out[:M]


def _add_ln_kernel(x_ref, y_ref, g_ref, b_ref, sum_ref, out_ref, *, eps, act):
    s = x_ref[...].astype(jnp.float32) + y_ref[...].astype(jnp.float32)
    sum_ref[...] = s.astype(sum_ref.dtype)
    mu = jnp.mean(s, axis=-1, keepdims=True)
    var = jnp.mean(jnp.square(s - mu), axis=-1, keepdims=True)
    y = (s - mu) * lax.rsqrt(var + eps) * g_ref[...] + b_ref[...]
    if act == "gelu":
        y = jax.nn.gelu(y, approximate=True)
    out_ref[...] = y.astype(out_ref.dtype)


def add_layernorm(x2d, y2d, g, b, act="none", eps=1e-6, out_dtype=jnp.bfloat16):
    """Fused residual add + LayerNorm.  Returns (sum, normed)."""
    M, C = x2d.shape
    tm = _ln_tile(M, C)
    Mp = _ceil_to(M, tm)
    xp, yp = _pad_dim(x2d, 0, Mp), _pad_dim(y2d, 0, Mp)
    row = pl.BlockSpec((tm, C), lambda i: (i, 0))
    vec = pl.BlockSpec((1, C), lambda i: (0, 0))
    s, o = pl.pallas_call(
        functools.partial(_add_ln_kernel, eps=eps, act=act),
        out_shape=(jax.ShapeDtypeStruct((Mp, C), out_dtype),) * 2,
        grid=(Mp // tm,),
        in_specs=[row, row, vec, vec],
        out_specs=(row, row),
        compiler_params=pltpu.CompilerParams(dimension_semantics=("parallel",)),
    )(xp, yp, g.reshape(1, C).astype(jnp.float32), b.reshape(1, C).astype(jnp.float32))
    if Mp != M:
        s, o = s[:M], o[:M]
    return s, o


# ----------------------------------------------------------------------------
# Hypernetwork: all 4 per-token MLPs in ONE kernel launch (bf16 weights)
# ----------------------------------------------------------------------------
def _hyper_kernel(t_ref, w1_ref, b1_ref, w2_ref, b2_ref, w3_ref, b3_ref, o_ref):
    # TODO(synk): the 4 per-token MLPs could be batched into 3 dot_generals with a
    # batch dim; at 4 tokens the unrolled loop is equivalent and lowering-trivial.
    for i in range(4):
        t = t_ref[pl.ds(i, 1), :]                                        # (1, D)
        h = jnp.dot(t, w1_ref[i], preferred_element_type=jnp.float32)
        h = jnp.maximum(h + b1_ref[pl.ds(i, 1), :], 0.0).astype(w2_ref.dtype)
        h = jnp.dot(h, w2_ref[i], preferred_element_type=jnp.float32)
        h = jnp.maximum(h + b2_ref[pl.ds(i, 1), :], 0.0).astype(w3_ref.dtype)
        o = jnp.dot(h, w3_ref[i], preferred_element_type=jnp.float32)
        o_ref[pl.ds(i, 1), :] = o + b3_ref[pl.ds(i, 1), :]


def hyper_mlps(tokens, hp):
    cout = hp["w3"].shape[-1]
    return pl.pallas_call(
        _hyper_kernel,
        out_shape=jax.ShapeDtypeStruct((4, cout), jnp.float32),
        in_specs=[_vspec()] * 7, out_specs=_vspec(),
    )(tokens.astype(jnp.bfloat16), hp["w1"], hp["b1"],
      hp["w2"], hp["b2"], hp["w3"], hp["b3"])


# ----------------------------------------------------------------------------
# Convolutions (BatchNorm folded into the weights at init)
# ----------------------------------------------------------------------------
def _conv3x3_kernel(x0_ref, x1_ref, x2_ref, w_ref, bias_ref, o_ref, *, wo, act):
    acc = bias_ref[...].astype(jnp.float32)                       # (1, Cout)
    rows = (x0_ref, x1_ref, x2_ref)
    for d in range(3):                                            # row taps
        x_row = rows[d][0, 0]                                     # (Wp, Cin)
        for j in range(3):                                        # column taps
            acc = acc + jnp.dot(x_row[j:j + wo, :], w_ref[d * 3 + j],
                                preferred_element_type=jnp.float32)
    if act == "relu":
        acc = jnp.maximum(acc, 0.0)
    o_ref[0, 0] = acc.astype(o_ref.dtype)


def conv3x3_s1(x, wmat, bias, act="none", out_dtype=jnp.bfloat16):
    """Direct 3x3/stride-1/pad-1 conv: grid over (batch, output row); the 9 taps
    are accumulated in-kernel from 3 halo input rows (no im2col duplication)."""
    B, H, W, Cin = x.shape
    Cout = wmat.shape[1]
    w9 = wmat.reshape(9, Cin, Cout)
    xp = jnp.pad(x, ((0, 0), (1, 1), (1, 1), (0, 0)))
    Wp = W + 2
    in_specs = [pl.BlockSpec((1, 1, Wp, Cin), lambda b, r, d=d: (b, r + d, 0, 0))
                for d in range(3)]
    in_specs += [pl.BlockSpec((9, Cin, Cout), lambda b, r: (0, 0, 0)),
                 pl.BlockSpec((1, Cout), lambda b, r: (0, 0))]
    return pl.pallas_call(
        functools.partial(_conv3x3_kernel, wo=W, act=act),
        out_shape=jax.ShapeDtypeStruct((B, H, W, Cout), out_dtype),
        grid=(B, H),
        in_specs=in_specs,
        out_specs=pl.BlockSpec((1, 1, W, Cout), lambda b, r: (b, r, 0, 0)),
        compiler_params=pltpu.CompilerParams(
            dimension_semantics=("parallel", "parallel")),
    )(xp, xp, xp, w9, bias.astype(jnp.float32).reshape(1, Cout))


def conv2d(x, cp, act="none", out_dtype=jnp.bfloat16):
    kh, kw, s, p = cp["kh"], cp["kw"], cp["stride"], cp["pad"]
    B, H, W, Cin = x.shape
    Cout = cp["wmat"].shape[1]
    Ho = (H + 2 * p - kh) // s + 1
    Wo = (W + 2 * p - kw) // s + 1
    if kh == 3 and kw == 3 and s == 1 and p == 1:
        return conv3x3_s1(x, cp["wmat"], cp["bias"], act=act, out_dtype=out_dtype)
    if kh == 1 and kw == 1 and p == 0:
        patches = x[:, ::s, ::s, :].reshape(B * Ho * Wo, Cin)
    elif s == kh and kh == kw and p == 0 and H % kh == 0 and W % kw == 0:
        # non-overlapping patches (ViT patch-embed): pure reshape, no duplication
        t = x.reshape(B, Ho, kh, Wo, kw, Cin)
        patches = jnp.transpose(t, (0, 1, 3, 2, 4, 5)).reshape(B * Ho * Wo, kh * kw * Cin)
    else:
        # TODO(synk): strided convs (7x7 stem, 3x3/s2 downsampling) still use im2col;
        # a phase-decomposed direct kernel would remove the remaining k*k HBM dup.
        xp = jnp.pad(x, ((0, 0), (p, p), (p, p), (0, 0)))
        cols = []
        for i in range(kh):
            for j in range(kw):
                cols.append(xp[:, i:i + s * (Ho - 1) + 1:s,
                               j:j + s * (Wo - 1) + 1:s, :])
        patches = jnp.concatenate(cols, axis=-1).reshape(B * Ho * Wo, kh * kw * Cin)
    y = matmul_bias_act(patches, cp["wmat"], cp["bias"], act=act, out_dtype=out_dtype)
    return y.reshape(B, Ho, Wo, Cout)


def conv_transpose2x2(x, wmat, bias_tiled, act="none", out_dtype=jnp.bfloat16):
    """ConvTranspose2d k=2 s=2 as a fused matmul; bias/act fused in the epilogue."""
    B, H, W, Cin = x.shape
    Cout = wmat.shape[1] // 4
    y = matmul_bias_act(x.reshape(B * H * W, Cin), wmat, bias_tiled, act=act,
                        out_dtype=out_dtype)
    # TODO(synk): the 2x2 pixel shuffle is XLA glue; at real scale it should be
    # emitted from the matmul's out_spec or fused into the next kernel's read.
    y = y.reshape(B, H, W, 2, 2, Cout)
    y = jnp.transpose(y, (0, 1, 3, 2, 4, 5)).reshape(B, 2 * H, 2 * W, Cout)
    return y


# ----------------------------------------------------------------------------
# Modules
# ----------------------------------------------------------------------------
def basic_block(x, prm):
    out = conv2d(x, prm["conv1"], act="relu")          # conv+BN+relu fused
    out = conv2d(out, prm["conv2"], act="none")        # conv+BN fused
    sc = conv2d(x, prm["down"], act="none") if "down" in prm else x
    return add_act(out, sc, act="relu")


def cnn_encoder(x, p):
    out = conv2d(x, p["conv1"], act="relu")
    out = maxpool3x3s2(out)
    for layer in ("layer1", "layer2", "layer3"):
        for blk in p[layer]:
            out = basic_block(out, blk)
    return out                                         # (B, H/16, W/16, 4*base)


def sam_image_encoder(x, p):
    # TODO(synk): reduced ViT-H (32 blocks, 16 heads) to patch-embed + 1 single-head block + neck.
    emb = conv2d(x, p["patch"], act="none")            # (B, H/16, W/16, D)
    B, Hp, Wp, D = emb.shape
    t = emb.reshape(B * Hp * Wp, D)

    tn = layernorm(t, p["ln1_g"], p["ln1_b"])
    qkv = matmul_bias_act(tn, p["qkv_w"], p["qkv_b"])
    q, k, v = jnp.split(qkv, 3, axis=-1)
    o = attention(q, k, v)                             # 1/sqrt(D) folded into q proj
    o = matmul_bias_act(o, p["proj_w"], p["proj_b"])
    t, tn = add_layernorm(t, o, p["ln2_g"], p["ln2_b"])
    h = matmul_bias_act(tn, p["mlp_w1"], p["mlp_b1"], act="gelu")
    h = matmul_bias_act(h, p["mlp_w2"], p["mlp_b2"])
    t = add_act(t, h)
    t = matmul_bias_act(t, p["neck_w"])                # neck 1x1 conv
    t = layernorm(t, p["neck_g"], p["neck_b"])         # LayerNorm2d (channel norm)
    return t.reshape(B, Hp, Wp, D)


def prompt_encoder(p, B, Hp, Wp, D):
    sparse = jnp.zeros((B, 0, D), jnp.float32)                      # no points / boxes
    dense = jnp.broadcast_to(p["no_mask_embed"].reshape(1, 1, 1, D), (B, Hp, Wp, D))
    return sparse, dense


def mask_decoder(p, image_embeddings, image_pe, sparse, dense, multimask_output):
    B, Hp, Wp, D = image_embeddings.shape
    assert B == 1          # original forward uses curr_embedding.unsqueeze(0) -> batch 1
    num_mask_tokens = 4
    out_tok = jnp.concatenate([p["iou_token"], p["mask_tokens"]], axis=0)      # (5, D)
    tokens = jnp.concatenate(
        [jnp.broadcast_to(out_tok[None], (B,) + out_tok.shape), sparse], axis=1)
    n_tok = tokens.shape[1]

    src2d, kpe2d = src_kpe(image_embeddings.reshape(-1, D),
                           dense.reshape(-1, D),
                           jnp.broadcast_to(image_pe, (B, Hp, Wp, D)).reshape(-1, D))

    # TODO(synk): SAM TwoWayTransformer reduced to one token->image cross-attention + MLP block.
    t2d = tokens.reshape(B * n_tok, D)
    q = matmul_bias_act(t2d, p["attn_q_w"], p["attn_q_b"])
    k = matmul_bias_act(kpe2d, p["attn_k_w"], p["attn_k_b"])
    v = matmul_bias_act(src2d, p["attn_v_w"], p["attn_v_b"])
    ctx = attention(q, k, v)
    ctx = matmul_bias_act(ctx, p["attn_o_w"], p["attn_o_b"])
    _, t2d = add_layernorm(t2d, ctx, p["ln1_g"], p["ln1_b"])
    h = matmul_bias_act(t2d, p["mlp_w1"], p["mlp_b1"], act="relu")
    h = matmul_bias_act(h, p["mlp_w2"], p["mlp_b2"])
    _, t2d = add_layernorm(t2d, h, p["ln2_g"], p["ln2_b"])

    mask_tokens_out = t2d[1:1 + num_mask_tokens]       # (4, D)

    # output upscaling: ConvT(D->D/2)+LN2d+GELU + ConvT(D/2->D/4)+GELU (fused epilogues)
    src = src2d.reshape(B, Hp, Wp, D)
    u = conv_transpose2x2(src, p["up1_wmat"], p["up1_bias"])
    C1 = u.shape[-1]
    u2d = layernorm(u.reshape(-1, C1), p["up_ln_g"], p["up_ln_b"], act="gelu")
    u = conv_transpose2x2(u2d.reshape(B, 2 * Hp, 2 * Wp, C1),
                          p["up2_wmat"], p["up2_bias"], act="gelu")
    C2 = u.shape[-1]
    Hu, Wu = 4 * Hp, 4 * Wp

    hyper_in = hyper_mlps(mask_tokens_out, p["hyper"])             # (4, C2), 1 launch

    # masks = hyper_in @ upscaled^T, computed as (Hu*Wu, C2) @ (C2, 4): N kept at
    # the true 4 columns (no 128-pad + re-slice); f32 out (final result).
    m = matmul_bias_act(u.reshape(B * Hu * Wu, C2), jnp.transpose(hyper_in),
                        out_dtype=jnp.float32)
    # TODO(synk): at real scale the small transpose below should be folded into the
    # producing kernel's out_spec.
    masks = jnp.transpose(m).reshape(B, num_mask_tokens, Hu, Wu)

    # NOTE: IoU head dropped — SAM_LST.forward never returns iou_predictions.

    if multimask_output:
        masks = masks[:, 1:, :, :]
    else:
        masks = masks[:, 0:1, :, :]
    return masks  # NCHW: (B, n_masks, Hu, Wu)


def sam_lst_forward(params, input_images_nchw, multimask_output=True):
    x = jnp.transpose(input_images_nchw, (0, 2, 3, 1)).astype(jnp.bfloat16)  # -> NHWC
    cnn_feat = cnn_encoder(x, params["cnn"])                   # (B, H/16, W/16, D)
    img_emb = sam_image_encoder(x, params["sam_enc"])          # (B, H/16, W/16, D)
    B, Hp, Wp, D = img_emb.shape
    fused = gate_fuse(img_emb, cnn_feat, params["alpha"])      # sigmoid(alpha) gate
    sparse, dense = prompt_encoder(params["prompt"], B, Hp, Wp, D)
    image_pe = params["prompt"]["dense_pe"]                    # (1, Hp, Wp, D)
    return mask_decoder(params["dec"], fused, image_pe, sparse, dense, multimask_output)


# ----------------------------------------------------------------------------
# Deterministic synthetic parameters (scaled-down widths), precomputed for the
# kernels: BN folded into conv weights, attention scale folded into q projection.
# ----------------------------------------------------------------------------
class ParamGen:
    def __init__(self, key):
        self.key = key
        self.i = 0

    def normal(self, shape, scale=0.05):
        self.i += 1
        return scale * jax.random.normal(jax.random.fold_in(self.key, self.i), shape, jnp.float32)

    def bn(self, c):  # folded BatchNorm (eval): scale, bias
        return 1.0 + self.normal((c,), 0.02), self.normal((c,), 0.02)

    def ln(self, c):
        return 1.0 + self.normal((c,), 0.02), self.normal((c,), 0.02)


def init_params(key, base=8, D=32):
    pg = ParamGen(key)

    def conv_param(cout, cin, k, stride, pad, bn=True, bias=None):
        w = pg.normal((cout, cin, k, k))
        if bn:
            s, b = pg.bn(cout)
        else:
            s = jnp.ones((cout,), jnp.float32)
            b = jnp.zeros((cout,), jnp.float32) if bias is None else bias
        w = w * s[:, None, None, None]                           # fold BN scale
        wmat = jnp.transpose(w, (2, 3, 1, 0)).reshape(k * k * cin, cout)
        return {"wmat": wmat.astype(jnp.bfloat16), "bias": b.astype(jnp.float32),
                "kh": k, "kw": k, "stride": stride, "pad": pad}

    def block(cin, cout, stride):
        d = {"conv1": conv_param(cout, cin, 3, stride, 1),
             "conv2": conv_param(cout, cout, 3, 1, 1)}
        if stride != 1 or cin != cout:
            d["down"] = conv_param(cout, cin, 1, stride, 0)
        return d

    def lin(cin, cout):
        return pg.normal((cin, cout)).astype(jnp.bfloat16), pg.normal((cout,))

    cnn = {"conv1": conv_param(base, 3, 7, 2, 3)}
    cnn["layer1"] = [block(base, base, 1), block(base, base, 1)]
    cnn["layer2"] = [block(base, 2 * base, 2), block(2 * base, 2 * base, 1)]
    cnn["layer3"] = [block(2 * base, 4 * base, 2), block(4 * base, 4 * base, 1)]

    scale = 1.0 / math.sqrt(D)

    patch_b = pg.normal((D,))
    enc = {"patch": conv_param(D, 3, 16, 16, 0, bn=False, bias=patch_b)}
    enc["ln1_g"], enc["ln1_b"] = pg.ln(D)
    enc["qkv_w"], enc["qkv_b"] = lin(D, 3 * D)
    # fold the attention 1/sqrt(D) scale into the q slice of the qkv projection
    enc["qkv_w"] = enc["qkv_w"].at[:, :D].multiply(scale)
    enc["qkv_b"] = enc["qkv_b"].at[:D].multiply(scale)
    enc["proj_w"], enc["proj_b"] = lin(D, D)
    enc["ln2_g"], enc["ln2_b"] = pg.ln(D)
    enc["mlp_w1"], enc["mlp_b1"] = lin(D, 4 * D)
    enc["mlp_w2"], enc["mlp_b2"] = lin(4 * D, D)
    enc["neck_w"] = pg.normal((D, D)).astype(jnp.bfloat16)
    enc["neck_g"], enc["neck_b"] = pg.ln(D)

    prm = {"no_mask_embed": pg.normal((D,)), "dense_pe": pg.normal((1, 4, 4, D))}

    dec = {"iou_token": pg.normal((1, D)), "mask_tokens": pg.normal((4, D))}
    dec["attn_q_w"], dec["attn_q_b"] = lin(D, D)
    dec["attn_q_w"] = dec["attn_q_w"] * scale          # fold attention scale into q
    dec["attn_q_b"] = dec["attn_q_b"] * scale
    dec["attn_k_w"], dec["attn_k_b"] = lin(D, D)
    dec["attn_v_w"], dec["attn_v_b"] = lin(D, D)
    dec["attn_o_w"], dec["attn_o_b"] = lin(D, D)
    dec["ln1_g"], dec["ln1_b"] = pg.ln(D)
    dec["mlp_w1"], dec["mlp_b1"] = lin(D, 2 * D)
    dec["mlp_w2"], dec["mlp_b2"] = lin(2 * D, D)
    dec["ln2_g"], dec["ln2_b"] = pg.ln(D)

    # output upscaling: ConvTranspose weights reshaped to matmul form at init,
    # bias tiled over the 2x2 taps so it rides the matmul epilogue.
    up1_w, up1_b = pg.normal((D, D // 2, 2, 2)), pg.normal((D // 2,))
    dec["up1_wmat"] = jnp.transpose(up1_w, (0, 2, 3, 1)).reshape(D, 4 * (D // 2)).astype(jnp.bfloat16)
    dec["up1_bias"] = jnp.tile(up1_b, 4)
    dec["up_ln_g"], dec["up_ln_b"] = pg.ln(D // 2)
    up2_w, up2_b = pg.normal((D // 2, D // 4, 2, 2)), pg.normal((D // 4,))
    dec["up2_wmat"] = jnp.transpose(up2_w, (0, 2, 3, 1)).reshape(D // 2, 4 * (D // 4)).astype(jnp.bfloat16)
    dec["up2_bias"] = jnp.tile(up2_b, 4)

    # hypernetwork MLPs, stacked so all 4 run in one kernel launch (bf16 weights)
    dec["hyper"] = {
        "w1": jnp.stack([pg.normal((D, D)) for _ in range(4)]).astype(jnp.bfloat16),
        "b1": jnp.stack([pg.normal((D,)) for _ in range(4)]),
        "w2": jnp.stack([pg.normal((D, D)) for _ in range(4)]).astype(jnp.bfloat16),
        "b2": jnp.stack([pg.normal((D,)) for _ in range(4)]),
        "w3": jnp.stack([pg.normal((D, D // 4)) for _ in range(4)]).astype(jnp.bfloat16),
        "b3": jnp.stack([pg.normal((D // 4,)) for _ in range(4)]),
    }

    return {"cnn": cnn, "sam_enc": enc, "prompt": prm, "dec": dec,
            "alpha": jnp.asarray(0.0, jnp.float32)}


if __name__ == "__main__":
    key = jax.random.PRNGKey(0)
    params = init_params(jax.random.fold_in(key, 1))
    x = jax.random.normal(jax.random.fold_in(key, 2), (1, 3, 64, 64), jnp.float32)  # NCHW
    out = sam_lst_forward(params, x, multimask_output=True)
    out = jax.block_until_ready(out)
    assert out.shape == (1, 3, 16, 16), out.shape
    assert bool(jnp.all(jnp.isfinite(out)))
    print("KERNEL_OK")
</pallas_src>

<mosaic_0001>
module attributes {stable_mosaic.version = 11 : i64} {
  func.func @_mm_kernel(%arg0: i32, %arg1: i32, %arg2: i32, %arg3: memref<512x147xbf16, #tpu.memory_space<vmem>>, %arg4: memref<147x8xbf16, #tpu.memory_space<vmem>>, %arg5: memref<1x8xf32, #tpu.memory_space<vmem>>, %arg6: memref<512x8xbf16, #tpu.memory_space<vmem>>, %arg7: memref<512x8xf32, #tpu.memory_space<vmem>>) attributes {dimension_semantics = [#tpu.dimension_semantics<parallel>, #tpu.dimension_semantics<parallel>, #tpu.dimension_semantics<arbitrary>], iteration_bounds = array<i64: 2, 1, 1>, scalar_prefetch = 0 : i64, scratch_operands = 1 : i64, tpu.core_type = #tpu.core_type<tc>, window_params = [{transform_indices = @transform_0, window_bounds = array<i64: 512, 147>}, {transform_indices = @transform_1, window_bounds = array<i64: 147, 8>}, {transform_indices = @transform_2, window_bounds = array<i64: 1, 8>}, {transform_indices = @transform_3, window_bounds = array<i64: 512, 8>}]} {
    %c0_i32 = arith.constant 0 : i32
    %0 = arith.cmpi eq, %arg2, %c0_i32 : i32
    %1 = arith.extui %0 : i1 to i32
    %c0_i32_0 = arith.constant 0 : i32
    %2 = arith.cmpi ne, %1, %c0_i32_0 : i32
    scf.if %2 {
      %cst_10 = arith.constant 0.000000e+00 : f32
      %12 = vector.broadcast %cst_10 : f32 to vector<512x8xf32>
      %c0_11 = arith.constant 0 : index
      %c0_12 = arith.constant 0 : index
      %13 = vector.load %arg7[%c0_11, %c0_12] : memref<512x8xf32, #tpu.memory_space<vmem>>, vector<512x8xf32>
      tpu.vector_store %arg7[%c0_11, %c0_12], %12 {strides = array<i32>} : memref<512x8xf32, #tpu.memory_space<vmem>>, vector<512x8xf32>,
    } else {
    }
    %c0 = arith.constant 0 : index
    %c0_1 = arith.constant 0 : index
    %3 = vector.load %arg7[%c0, %c0_1] : memref<512x8xf32, #tpu.memory_space<vmem>>, vector<512x8xf32>
    %c0_2 = arith.constant 0 : index
    %c0_3 = arith.constant 0 : index
    %4 = vector.load %arg3[%c0_2, %c0_3] : memref<512x147xbf16, #tpu.memory_space<vmem>>, vector<512x147xbf16>
    %c0_4 = arith.constant 0 : index
    %c0_5 = arith.constant 0 : index
    %5 = vector.load %arg4[%c0_4, %c0_5] : memref<147x8xbf16, #tpu.memory_space<vmem>>, vector<147x8xbf16>
    %cst = arith.constant dense<0.000000e+00> : vector<512x8xf32>
    %6 = tpu.matmul %4, %5, %cst {dimension_numbers = #tpu.dot_dimension_numbers<[1], [0], [0], [1], [0, 0, 1, 1], [], []>} : vector<512x147xbf16>, vector<147x8xbf16>, vector<512x8xf32> -> vector<512x8xf32>
    %7 = arith.addf %3, %6 : vector<512x8xf32>
    %c0_6 = arith.constant 0 : index
    %c0_7 = arith.constant 0 : index
    %8 = vector.load %arg7[%c0_6, %c0_7] : memref<512x8xf32, #tpu.memory_space<vmem>>, vector<512x8xf32>
    tpu.vector_store %arg7[%c0_6, %c0_7], %7 {strides = array<i32>} : memref<512x8xf32, #tpu.memory_space<vmem>>, vector<512x8xf32>,
    %c0_i32_8 = arith.constant 0 : i32
    %9 = arith.cmpi eq, %arg2, %c0_i32_8 : i32
    %10 = arith.extui %9 : i1 to i32
    %c0_i32_9 = arith.constant 0 : i32
    %11 = arith.cmpi ne, %10, %c0_i32_9 : i32
    scf.if %11 {
      %c0_10 = arith.constant 0 : index
      %c0_11 = arith.constant 0 : index
      %12 = vector.load %arg7[%c0_10, %c0_11] : memref<512x8xf32, #tpu.memory_space<vmem>>, vector<512x8xf32>
      %c0_12 = arith.constant 0 : index
      %c0_13 = arith.constant 0 : index
      %13 = vector.load %arg5[%c0_12, %c0_13] : memref<1x8xf32, #tpu.memory_space<vmem>>, vector<1x8xf32>
      %14 = vector.broadcast %13 : vector<1x8xf32> to vector<512x8xf32>
      %15 = arith.addf %12, %14 : vector<512x8xf32>
      %cst_14 = arith.constant 0.000000e+00 : f32
      %16 = vector.broadcast %cst_14 : f32 to vector<512x8xf32>
      %17 = arith.maximumf %15, %16 : vector<512x8xf32>
      %18 = arith.truncf %17 : vector<512x8xf32> to vector<512x8xbf16>
      %c0_15 = arith.constant 0 : index
      %c0_16 = arith.constant 0 : index
      %19 = vector.load %arg6[%c0_15, %c0_16] : memref<512x8xbf16, #tpu.memory_space<vmem>>, vector<512x8xbf16>
      tpu.vector_store %arg6[%c0_15, %c0_16], %18 {strides = array<i32>} : memref<512x8xbf16, #tpu.memory_space<vmem>>, vector<512x8xbf16>,
    } else {
    }
    return
  }
  func.func @transform_0(%arg0: i32, %arg1: i32, %arg2: i32) -> (i32, i32) {
    %c0_i32 = arith.constant 0 : i32
    return %arg0, %arg2 : i32, i32
  }
  func.func @transform_1(%arg0: i32, %arg1: i32, %arg2: i32) -> (i32, i32) {
    %c0_i32 = arith.constant 0 : i32
    return %arg2, %arg1 : i32, i32
  }
  func.func @transform_2(%arg0: i32, %arg1: i32, %arg2: i32) -> (i32, i32) {
    %c0_i32 = arith.constant 0 : i32
    %c0_i32_0 = arith.constant 0 : i32
    return %c0_i32, %arg1 : i32, i32
  }
  func.func @transform_3(%arg0: i32, %arg1: i32, %arg2: i32) -> (i32, i32) {
    %c0_i32 = arith.constant 0 : i32
    return %arg0, %arg1 : i32, i32
  }
}

</mosaic_0001>

<llo_original>
// kernel: tpu_custom_call.1
$region0: #{tpu_custom_call.1}
  #allocation0 [shape = 'u32[]', space=smem, size = 0x4, offset = 0x4, fixed_abs, tag = 'smem constant byte address 0x4 - core index']
  #allocation1 [shape = 'u32[72,128]{1,0:T(1,128)}', space=vmem, size = 0x9000, scoped, tag = 'internal scratch']
  #allocation2 [shape = 'f32[512,8]{1,0:T(8,128)}', space=vmem, size = 0x40000, scoped, tag = 'scratch operand']
  %s0 = inlined_call_operand.vmem [shape: bf16[1024,147], index: 0, kind: input, shape index: {}]
  %s1 = inlined_call_operand.vmem [shape: bf16[147,8], index: 1, kind: input, shape index: {}]
  %s2 = inlined_call_operand.vmem [shape: f32[1,8], index: 2, kind: input, shape index: {}]
  %s3 = inlined_call_operand.vmem [shape: bf16[1024,8], index: 3, kind: output, shape index: {}]
  %s4 = sld [smem:[#allocation0]]
  $region53: #{tpu_custom_call.1} parent=0
    _
  %s6 = ssub.s32 1, %s4
  %s7 = scalar_select 0, %s6, %s4
  loop: start=0, step=1, limit=4
  $region2: #{tpu_custom_call.1} parent=0 // loop_pre_header
    _
  $region3: #{tpu_custom_call.1} parent=0 // loop_header
    %s9 = sphi 0, %s13
    %p10 = scmp.ge.s32.totalorder %s9, 4
    %s16 = sphi 0, %s35
    %s17 = sphi 0, %s31
    %s18 = sphi 0, %s27
    %s19 = sphi 0, %s16
    %s20 = sphi 0, %s17
    %s21 = sphi 0, %s18
    %s22 = sphi 0, %s19
    %s23 = sphi 0, %s20
    %s24 = sphi 0, %s21
    %s40 = sphi 0, %s42
    %s43 = sphi 0, %s40
    %s44 = sphi 0, %s43
    %s60 = sphi 0, %s44
    %s68 = sphi 0, %s70
    %s71 = sphi 0, %s68
    %s72 = sphi 0, %s71
    %s88 = sphi 0, %s72
    %s94 = sphi 0, %s96
    %s97 = sphi 0, %s94
    %s98 = sphi 0, %s97
    %s114 = sphi 0, %s98
    %s122 = sphi 0, %s124
    %s125 = sphi 0, %s122
    %s126 = sphi 0, %s125
    %s142 = sphi 0, %s126
  $region4: #{tpu_custom_call.1} parent=0 // loop_header_branch
    %12 = sbr.rel (%p10) target = $region8
  $region5: #{tpu_custom_call.1} parent=0 // loop_body
    %s14 = ssub.s32 %s9, 1
    %s15 = ssub.s32 %s9, 2
    %s25 = sadd.s32 1, %s18
    %p26 = scmp.ge.s32.totalorder %s25, 1
    %s27 = scalar_select %p26, 0, %s25
    %s28 = sadd.s32 1, %s17
    %s29 = scalar_select %p26, %s28, %s17
    %p30 = scmp.ge.s32.totalorder %s29, 1
    %s31 = scalar_select %p30, 0, %s29
    %s32 = sadd.s32 1, %s16
    %s33 = scalar_select %p30, %s32, %s16
    %p34 = scmp.ge.s32.totalorder %s33, 2
    %s35 = scalar_select %p34, 0, %s33
    %s36 = ssub.s32 %s16, %s35
    %s37 = ssub.s32 %s18, %s27
    %s38 = sor.u32 %s36, %s37
    %p39 = scmp.eq.s32.totalorder %s38, 0
    %s41 = sadd.s32 %s40, 1
    %s42 = scalar_select %p39, %s40, %s41
    %p45 = pneg %p39
    %p46 = scmp.eq.s32.totalorder %s9, 1
    %p47 = por %p45, %p46
    %p48 = scmp.ne.s32.totalorder %s40, %s43
    %p49 = scmp.eq.s32.totalorder %s9, 0
    %p50 = por %p48, %p49
    %p51 = scmp.ne.s32.totalorder %s40, %s43
    %p52 = scmp.eq.s32.totalorder %s14, 1
    %p53 = por %p51, %p52
    %p54 = scmp.ne.s32.totalorder %s43, %s44
    %p55 = scmp.eq.s32.totalorder %s14, 0
    %p56 = por %p54, %p55
    %p57 = scmp.ne.s32.totalorder %s43, %s44
    %p58 = scmp.eq.s32.totalorder %s15, 1
    %p59 = por %p57, %p58
    %p61 = scmp.ne.s32.totalorder %s44, %s60
    %p62 = scmp.eq.s32.totalorder %s15, 0
    %p63 = por %p61, %p62
    %s64 = ssub.s32 %s18, %s27
    %s65 = ssub.s32 %s17, %s31
    %s66 = sor.u32 %s64, %s65
    %p67 = scmp.eq.s32.totalorder %s66, 0
    %s69 = sadd.s32 %s68, 1
    %s70 = scalar_select %p67, %s68, %s69
    %p73 = pneg %p67
    %p74 = scmp.eq.s32.totalorder %s9, 1
    %p75 = por %p73, %p74
    %p76 = scmp.ne.s32.totalorder %s68, %s71
    %p77 = scmp.eq.s32.totalorder %s9, 0
    %p78 = por %p76, %p77
    %p79 = scmp.ne.s32.totalorder %s68, %s71
    %p80 = scmp.eq.s32.totalorder %s14, 1
    %p81 = por %p79, %p80
    %p82 = scmp.ne.s32.totalorder %s71, %s72
    %p83 = scmp.eq.s32.totalorder %s14, 0
    %p84 = por %p82, %p83
    %p85 = scmp.ne.s32.totalorder %s71, %s72
    %p86 = scmp.eq.s32.totalorder %s15, 1
    %p87 = por %p85, %p86
    %p89 = scmp.ne.s32.totalorder %s72, %s88
    %p90 = scmp.eq.s32.totalorder %s15, 0
    %p91 = por %p89, %p90
    %s92 = ssub.s32 %s17, %s31
    %p93 = scmp.eq.s32.totalorder %s92, 0
    %s95 = sadd.s32 %s94, 1
    %s96 = scalar_select %p93, %s94, %s95
    %p99 = pneg %p93
    %p100 = scmp.eq.s32.totalorder %s9, 1
    %p101 = por %p99, %p100
    %p102 = scmp.ne.s32.totalorder %s94, %s97
    %p103 = scmp.eq.s32.totalorder %s9, 0
    %p104 = por %p102, %p103
    %p105 = scmp.ne.s32.totalorder %s94, %s97
    %p106 = scmp.eq.s32.totalorder %s14, 1
    %p107 = por %p105, %p106
    %p108 = scmp.ne.s32.totalorder %s97, %s98
    %p109 = scmp.eq.s32.totalorder %s14, 0
    %p110 = por %p108, %p109
    %p111 = scmp.ne.s32.totalorder %s97, %s98
    %p112 = scmp.eq.s32.totalorder %s15, 1
    %p113 = por %p111, %p112
    %p115 = scmp.ne.s32.totalorder %s98, %s114
    %p116 = scmp.eq.s32.totalorder %s15, 0
    %p117 = por %p115, %p116
    %s118 = ssub.s32 %s16, %s35
    %s119 = ssub.s32 %s17, %s31
    %s120 = sor.u32 %s118, %s119
    %p121 = scmp.eq.s32.totalorder %s120, 0
    %s123 = sadd.s32 %s122, 1
    %s124 = scalar_select %p121, %s122, %s123
    %p127 = pneg %p121
    %p128 = scmp.eq.s32.totalorder %s9, 1
    %p129 = por %p127, %p128
    %p130 = scmp.ne.s32.totalorder %s122, %s125
    %p131 = scmp.eq.s32.totalorder %s9, 0
    %p132 = por %p130, %p131
    %p133 = scmp.ne.s32.totalorder %s122, %s125
    %p134 = scmp.eq.s32.totalorder %s14, 1
    %p135 = por %p133, %p134
    %p136 = scmp.ne.s32.totalorder %s125, %s126
    %p137 = scmp.eq.s32.totalorder %s14, 0
    %p138 = por %p136, %p137
    %p139 = scmp.ne.s32.totalorder %s125, %s126
    %p140 = scmp.eq.s32.totalorder %s15, 1
    %p141 = por %p139, %p140
    %p143 = scmp.ne.s32.totalorder %s126, %s142
    %p144 = scmp.eq.s32.totalorder %s15, 0
    %p145 = por %p143, %p144
    %p146 = scmp.le.s32.totalorder 1, %s9
    %p147 = scmp.lt.s32.totalorder %s9, 3
    %p148 = pnand %p146, %p147
    %p149 = pneg %p148
    // Predicated region
    $region9: #{tpu_custom_call.1} parent=5 // pred_check
      _
    $region10: #{tpu_custom_call.1} parent=5 // pred_check_branch
      %151 = sbr.rel (%p148) target = $region12
    $region11: #{tpu_custom_call.1} parent=5 // pred_region
      %s152 = ssub.s32 %s9, 1
      // Predicated region
      $region13: #{tpu_custom_call.1} parent=11 // pred_check
        %p153 = pneg %p84
      $region14: #{tpu_custom_call.1} parent=11 // pred_check_branch
        %155 = sbr.rel (%p153) target = $region16
      $region15: #{tpu_custom_call.1} parent=11 // pred_region
        %s156 = smul.u32 19, %s21
        %p157 = scmp.lt.s32.totalorder %s156, 18
        %s158 = scalar_select %p157, %s156, 18
        %p159 = scmp.lt.s32.totalorder %s20, 0
        %s160 = scalar_select %p159, %s20, 0
        %s161 = sadd.s32 %s160, %s158
        %s162 = smul.addr %s161, 4
        %s163 = scalar_lea.vmem %s1, %s162
        %s164 = smul.u32 19, %s21
      $region16: #{tpu_custom_call.1} parent=11 // pred_fallthru
        _
      // Predicated region
      $region17: #{tpu_custom_call.1} parent=11 // pred_check
        %p165 = pneg %p110
      $region18: #{tpu_custom_call.1} parent=11 // pred_check_branch
        %167 = sbr.rel (%p165) target = $region20
      $region19: #{tpu_custom_call.1} parent=11 // pred_region
        %p168 = scmp.lt.s32.totalorder %s20, 0
        %s169 = scalar_select %p168, %s20, 0
        %s170 = scalar_lea.vmem %s2, %s169
      $region20: #{tpu_custom_call.1} parent=11 // pred_fallthru
        _
    $region12: #{tpu_custom_call.1} parent=5 // pred_fallthru
      _
    %p171 = scmp.lt.s32.totalorder %s9, 2
    // Predicated region
    $region21: #{tpu_custom_call.1} parent=5 // pred_check
      %p172 = pneg %p171
    $region22: #{tpu_custom_call.1} parent=5 // pred_check_branch
      %174 = sbr.rel (%p172) target = $region24
    $region23: #{tpu_custom_call.1} parent=5 // pred_region
      // Predicated region
      $region25: #{tpu_custom_call.1} parent=23 // pred_check
        %p175 = pneg %p50
      $region26: #{tpu_custom_call.1} parent=23 // pred_check_branch
        %177 = sbr.rel (%p175) target = $region28
      $region27: #{tpu_custom_call.1} parent=23 // pred_region
        %s178 = smul.u32 64, %s16
        %s179 = smul.u32 2, %s18
        %p180 = scmp.lt.s32.totalorder %s178, 127
        %s181 = scalar_select %p180, %s178, 127
        %p182 = scmp.lt.s32.totalorder %s179, 1
        %s183 = scalar_select %p182, %s179, 1
        %s184 = smul.addr %s181, 2
        %s185 = sadd.s32 %s183, %s184
        %s186 = smul.addr %s185, 4
        %s187 = scalar_lea.vmem %s0, %s186
        %s188 = smul.u32 64, %s16
        %s189 = smul.u32 2, %s18
      $region28: #{tpu_custom_call.1} parent=23 // pred_fallthru
        _
    $region24: #{tpu_custom_call.1} parent=5 // pred_fallthru
      _
    %p190 = scmp.le.s32.totalorder 1, %s9
    %p191 = scmp.lt.s32.totalorder %s9, 3
    %p192 = pnand %p190, %p191
    %p193 = pneg %p192
    // Predicated region
    $region29: #{tpu_custom_call.1} parent=5 // pred_check
      _
    $region30: #{tpu_custom_call.1} parent=5 // pred_check_branch
      %195 = sbr.rel (%p192) target = $region32
    $region31: #{tpu_custom_call.1} parent=5 // pred_region
      %s196 = ssub.s32 %s9, 1
      %s197 = smul.u32 64, %s19
      %s198 = smul.u32 2, %s21
      %p199 = scmp.lt.s32.totalorder %s197, 127
      %s200 = scalar_select %p199, %s197, 127
      %p201 = scmp.lt.s32.totalorder %s198, 1
      %s202 = scalar_select %p201, %s198, 1
      %s203 = smul.addr %s200, 2
      %s204 = sadd.s32 %s202, %s203
      %s205 = smul.addr %s204, 4
      %s206 = scalar_lea.vmem %s0, %s205
      %p207 = pneg %p56
      %p208 = pneg %p53
      %s209 = smul.u32 19, %s21
      %p210 = scmp.lt.s32.totalorder %s209, 18
      %s211 = scalar_select %p210, %s209, 18
      %p212 = scmp.lt.s32.totalorder %s20, 0
      %s213 = scalar_select %p212, %s20, 0
      %s214 = sadd.s32 %s213, %s211
      %s215 = smul.addr %s214, 4
      %s216 = scalar_lea.vmem %s1, %s215
      %p217 = pneg %p84
      %p218 = pneg %p81
      %p219 = scmp.lt.s32.totalorder %s20, 0
      %s220 = scalar_select %p219, %s20, 0
      %s221 = scalar_lea.vmem %s2, %s220
      %p222 = pneg %p110
      %p223 = pneg %p107
      %p224 = pneg %p138
      %p225 = pneg %p135
      %s226 = smul.u32 64, %s19
      %p227 = scmp.lt.s32.totalorder %s226, 127
      %s228 = scalar_select %p227, %s226, 127
      %p229 = scmp.lt.s32.totalorder %s20, 0
      %s230 = scalar_select %p229, %s20, 0
      %s231 = sadd.s32 %s230, %s228
      %s232 = smul.addr %s231, 4
      %s233 = scalar_lea.vmem %s3, %s232
      %s234 = smul.u32 64, %s19
      %s235 = smul.u32 2, %s21
      %p236 = scmp.lt.s32.totalorder %s234, 127
      %s237 = scalar_select %p236, %s234, 127
      %p238 = scmp.lt.s32.totalorder %s235, 1
      %s239 = scalar_select %p238, %s235, 1
      %s240 = smul.addr %s237, 2
      %s241 = sadd.s32 %s239, %s240
      %s242 = smul.addr %s241, 4
      %s243 = scalar_lea.vmem %s0, %s242
      %s244 = smul.u32 64, %s19
      %s245 = smul.u32 2, %s21
      %s246 = smul.u32 19, %s21
      %p247 = scmp.lt.s32.totalorder %s246, 18
      %s248 = scalar_select %p247, %s246, 18
      %p249 = scmp.lt.s32.totalorder %s20, 0
      %s250 = scalar_select %p249, %s20, 0
      %s251 = sadd.s32 %s250, %s248
      %s252 = smul.addr %s251, 4
      %s253 = scalar_lea.vmem %s1, %s252
      %s254 = smul.u32 19, %s21
      %p255 = scmp.lt.s32.totalorder %s20, 0
      %s256 = scalar_select %p255, %s20, 0
      %s257 = scalar_lea.vmem %s2, %s256
      %s258 = smul.u32 64, %s19
      %p259 = scmp.lt.s32.totalorder %s258, 127
      %s260 = scalar_select %p259, %s258, 127
      %p261 = scmp.lt.s32.totalorder %s20, 0
      %s262 = scalar_select %p261, %s20, 0
      %s263 = sadd.s32 %s262, %s260
      %s264 = smul.addr %s263, 4
      %s265 = scalar_lea.vmem %s3, %s264
      %s266 = smul.u32 64, %s19
      %p268 = scmp.eq.s32.totalorder %s21, 0
      // Predicated region
      $region33: #{tpu_custom_call.1} parent=31 // pred_check
        %p269 = pneg %p268
      $region34: #{tpu_custom_call.1} parent=31 // pred_check_branch
        %271 = sbr.rel (%p269) target = $region36
      $region35: #{tpu_custom_call.1} parent=31 // pred_region
        %vm272 = vcmask 64512
        %273 = vst.msk [vmem:[#allocation2] sm:$0xff] %vm272, 0.0
        %274 = vst.msk [vmem:[#allocation2 + $0x8] sm:$0xff] %vm272, 0.0
        %275 = vst.msk [vmem:[#allocation2 + $0x10] sm:$0xff] %vm272, 0.0
        %276 = vst.msk [vmem:[#allocation2 + $0x18] sm:$0xff] %vm272, 0.0
        %277 = vst.msk [vmem:[#allocation2 + $0x20] sm:$0xff] %vm272, 0.0
        %278 = vst.msk [vmem:[#allocation2 + $0x28] sm:$0xff] %vm272, 0.0
        %279 = vst.msk [vmem:[#allocation2 + $0x30] sm:$0xff] %vm272, 0.0
        %280 = vst.msk [vmem:[#allocation2 + $0x38] sm:$0xff] %vm272, 0.0
        %281 = vst.msk [vmem:[#allocation2 + $0x40] sm:$0xff] %vm272, 0.0
        %282 = vst.msk [vmem:[#allocation2 + $0x48] sm:$0xff] %vm272, 0.0
        %283 = vst.msk [vmem:[#allocation2 + $0x50] sm:$0xff] %vm272, 0.0
        %284 = vst.msk [vmem:[#allocation2 + $0x58] sm:$0xff] %vm272, 0.0
        %285 = vst.msk [vmem:[#allocation2 + $0x60] sm:$0xff] %vm272, 0.0
        %286 = vst.msk [vmem:[#allocation2 + $0x68] sm:$0xff] %vm272, 0.0
        %287 = vst.msk [vmem:[#allocation2 + $0x70] sm:$0xff] %vm272, 0.0
        %288 = vst.msk [vmem:[#allocation2 + $0x78] sm:$0xff] %vm272, 0.0
        %289 = vst.msk [vmem:[#allocation2 + $0x80] sm:$0xff] %vm272, 0.0
        %290 = vst.msk [vmem:[#allocation2 + $0x88] sm:$0xff] %vm272, 0.0
        %291 = vst.msk [vmem:[#allocation2 + $0x90] sm:$0xff] %vm272, 0.0
        %292 = vst.msk [vmem:[#allocation2 + $0x98] sm:$0xff] %vm272, 0.0
        %293 = vst.msk [vmem:[#allocation2 + $0xa0] sm:$0xff] %vm272, 0.0
        %294 = vst.msk [vmem:[#allocation2 + $0xa8] sm:$0xff] %vm272, 0.0
        %295 = vst.msk [vmem:[#allocation2 + $0xb0] sm:$0xff] %vm272, 0.0
        %296 = vst.msk [vmem:[#allocation2 + $0xb8] sm:$0xff] %vm272, 0.0
        %297 = vst.msk [vmem:[#allocation2 + $0xc0] sm:$0xff] %vm272, 0.0
        %298 = vst.msk [vmem:[#allocation2 + $0xc8] sm:$0xff] %vm272, 0.0
        %299 = vst.msk [vmem:[#allocation2 + $0xd0] sm:$0xff] %vm272, 0.0
        %300 = vst.msk [vmem:[#allocation2 + $0xd8] sm:$0xff] %vm272, 0.0
        %301 = vst.msk [vmem:[#allocation2 + $0xe0] sm:$0xff] %vm272, 0.0
        %302 = vst.msk [vmem:[#allocation2 + $0xe8] sm:$0xff] %vm272, 0.0
        %303 = vst.msk [vmem:[#allocation2 + $0xf0] sm:$0xff] %vm272, 0.0
        %304 = vst.msk [vmem:[#allocation2 + $0xf8] sm:$0xff] %vm272, 0.0
        %305 = vst.msk [vmem:[#allocation2 + $0x100] sm:$0xff] %vm272, 0.0
        %306 = vst.msk [vmem:[#allocation2 + $0x108] sm:$0xff] %vm272, 0.0
        %307 = vst.msk [vmem:[#allocation2 + $0x110] sm:$0xff] %vm272, 0.0
        %308 = vst.msk [vmem:[#allocation2 + $0x118] sm:$0xff] %vm272, 0.0
        %309 = vst.msk [vmem:[#allocation2 + $0x120] sm:$0xff] %vm272, 0.0
        %310 = vst.msk [vmem:[#allocation2 + $0x128] sm:$0xff] %vm272, 0.0
        %311 = vst.msk [vmem:[#allocation2 + $0x130] sm:$0xff] %vm272, 0.0
        %312 = vst.msk [vmem:[#allocation2 + $0x138] sm:$0xff] %vm272, 0.0
        %313 = vst.msk [vmem:[#allocation2 + $0x140] sm:$0xff] %vm272, 0.0
        %314 = vst.msk [vmem:[#allocation2 + $0x148] sm:$0xff] %vm272, 0.0
        %315 = vst.msk [vmem:[#allocation2 + $0x150] sm:$0xff] %vm272, 0.0
        %316 = vst.msk [vmem:[#allocation2 + $0x158] sm:$0xff] %vm272, 0.0
        %317 = vst.msk [vmem:[#allocation2 + $0x160] sm:$0xff] %vm272, 0.0
        %318 = vst.msk [vmem:[#allocation2 + $0x168] sm:$0xff] %vm272, 0.0
        %319 = vst.msk [vmem:[#allocation2 + $0x170] sm:$0xff] %vm272, 0.0
        %320 = vst.msk [vmem:[#allocation2 + $0x178] sm:$0xff] %vm272, 0.0
        %321 = vst.msk [vmem:[#allocation2 + $0x180] sm:$0xff] %vm272, 0.0
        %322 = vst.msk [vmem:[#allocation2 + $0x188] sm:$0xff] %vm272, 0.0
        %323 = vst.msk [vmem:[#allocation2 + $0x190] sm:$0xff] %vm272, 0.0
        %324 = vst.msk [vmem:[#allocation2 + $0x198] sm:$0xff] %vm272, 0.0
        %325 = vst.msk [vmem:[#allocation2 + $0x1a0] sm:$0xff] %vm272, 0.0
        %326 = vst.msk [vmem:[#allocation2 + $0x1a8] sm:$0xff] %vm272, 0.0
        %327 = vst.msk [vmem:[#allocation2 + $0x1b0] sm:$0xff] %vm272, 0.0
        %328 = vst.msk [vmem:[#allocation2 + $0x1b8] sm:$0xff] %vm272, 0.0
        %329 = vst.msk [vmem:[#allocation2 + $0x1c0] sm:$0xff] %vm272, 0.0
        %330 = vst.msk [vmem:[#allocation2 + $0x1c8] sm:$0xff] %vm272, 0.0
        %331 = vst.msk [vmem:[#allocation2 + $0x1d0] sm:$0xff] %vm272, 0.0
        %332 = vst.msk [vmem:[#allocation2 + $0x1d8] sm:$0xff] %vm272, 0.0
        %333 = vst.msk [vmem:[#allocation2 + $0x1e0] sm:$0xff] %vm272, 0.0
        %334 = vst.msk [vmem:[#allocation2 + $0x1e8] sm:$0xff] %vm272, 0.0
        %335 = vst.msk [vmem:[#allocation2 + $0x1f0] sm:$0xff] %vm272, 0.0
        %336 = vst.msk [vmem:[#allocation2 + $0x1f8] sm:$0xff] %vm272, 0.0
      $region36: #{tpu_custom_call.1} parent=31 // pred_fallthru
        _
      %v337 = vld [vmem:[#allocation2] sm:$0xff]
      %v338 = vld [vmem:[#allocation2 + $0x8] sm:$0xff]
      %v339 = vld [vmem:[#allocation2 + $0x10] sm:$0xff]
      %v340 = vld [vmem:[#allocation2 + $0x18] sm:$0xff]
      %v341 = vld [vmem:[#allocation2 + $0x20] sm:$0xff]
      %v342 = vld [vmem:[#allocation2 + $0x28] sm:$0xff]
      %v343 = vld [vmem:[#allocation2 + $0x30] sm:$0xff]
      %v344 = vld [vmem:[#allocation2 + $0x38] sm:$0xff]
      %v345 = vld [vmem:[#allocation2 + $0x40] sm:$0xff]
      %v346 = vld [vmem:[#allocation2 + $0x48] sm:$0xff]
      %v347 = vld [vmem:[#allocation2 + $0x50] sm:$0xff]
      %v348 = vld [vmem:[#allocation2 + $0x58] sm:$0xff]
      %v349 = vld [vmem:[#allocation2 + $0x60] sm:$0xff]
      %v350 = vld [vmem:[#allocation2 + $0x68] sm:$0xff]
      %v351 = vld [vmem:[#allocation2 + $0x70] sm:$0xff]
      %v352 = vld [vmem:[#allocation2 + $0x78] sm:$0xff]
      %v353 = vld [vmem:[#allocation2 + $0x80] sm:$0xff]
      %v354 = vld [vmem:[#allocation2 + $0x88] sm:$0xff]
      %v355 = vld [vmem:[#allocation2 + $0x90] sm:$0xff]
      %v356 = vld [vmem:[#allocation2 + $0x98] sm:$0xff]
      %v357 = vld [vmem:[#allocation2 + $0xa0] sm:$0xff]
      %v358 = vld [vmem:[#allocation2 + $0xa8] sm:$0xff]
      %v359 = vld [vmem:[#allocation2 + $0xb0] sm:$0xff]
      %v360 = vld [vmem:[#allocation2 + $0xb8] sm:$0xff]
      %v361 = vld [vmem:[#allocation2 + $0xc0] sm:$0xff]
      %v362 = vld [vmem:[#allocation2 + $0xc8] sm:$0xff]
      %v363 = vld [vmem:[#allocation2 + $0xd0] sm:$0xff]
      %v364 = vld [vmem:[#allocation2 + $0xd8] sm:$0xff]
      %v365 = vld [vmem:[#allocation2 + $0xe0] sm:$0xff]
      %v366 = vld [vmem:[#allocation2 + $0xe8] sm:$0xff]
      %v367 = vld [vmem:[#allocation2 + $0xf0] sm:$0xff]
      %v368 = vld [vmem:[#allocation2 + $0xf8] sm:$0xff]
      %v369 = vld [vmem:[#allocation2 + $0x100] sm:$0xff]
      %v370 = vld [vmem:[#allocation2 + $0x108] sm:$0xff]
      %v371 = vld [vmem:[#allocation2 + $0x110] sm:$0xff]
      %v372 = vld [vmem:[#allocation2 + $0x118] sm:$0xff]
      %v373 = vld [vmem:[#allocation2 + $0x120] sm:$0xff]
      %v374 = vld [vmem:[#allocation2 + $0x128] sm:$0xff]
      %v375 = vld [vmem:[#allocation2 + $0x130] sm:$0xff]
      %v376 = vld [vmem:[#allocation2 + $0x138] sm:$0xff]
      %v377 = vld [vmem:[#allocation2 + $0x140] sm:$0xff]
      %v378 = vld [vmem:[#allocation2 + $0x148] sm:$0xff]
      %v379 = vld [vmem:[#allocation2 + $0x150] sm:$0xff]
      %v380 = vld [vmem:[#allocation2 + $0x158] sm:$0xff]
      %v381 = vld [vmem:[#allocation2 + $0x160] sm:$0xff]
      %v382 = vld [vmem:[#allocation2 + $0x168] sm:$0xff]
      %v383 = vld [vmem:[#allocation2 + $0x170] sm:$0xff]
      %v384 = vld [vmem:[#allocation2 + $0x178] sm:$0xff]
      %v385 = vld [vmem:[#allocation2 + $0x180] sm:$0xff]
      %v386 = vld [vmem:[#allocation2 + $0x188] sm:$0xff]
      %v387 = vld [vmem:[#allocation2 + $0x190] sm:$0xff]
      %v388 = vld [vmem:[#allocation2 + $0x198] sm:$0xff]
      %v389 = vld [vmem:[#allocation2 + $0x1a0] sm:$0xff]
      %v390 = vld [vmem:[#allocation2 + $0x1a8] sm:$0xff]
      %v391 = vld [vmem:[#allocation2 + $0x1b0] sm:$0xff]
      %v392 = vld [vmem:[#allocation2 + $0x1b8] sm:$0xff]
      %v393 = vld [vmem:[#allocation2 + $0x1c0] sm:$0xff]
      %v394 = vld [vmem:[#allocation2 + $0x1c8] sm:$0xff]
      %v395 = vld [vmem:[#allocation2 + $0x1d0] sm:$0xff]
      %v396 = vld [vmem:[#allocation2 + $0x1d8] sm:$0xff]
      %v397 = vld [vmem:[#allocation2 + $0x1e0] sm:$0xff]
      %v398 = vld [vmem:[#allocation2 + $0x1e8] sm:$0xff]
      %v399 = vld [vmem:[#allocation2 + $0x1f0] sm:$0xff]
      %v400 = vld [vmem:[#allocation2 + $0x1f8] sm:$0xff]
      %v401 = vld [vmem:[%s243] sm:$0xff]
      %v402 = vld [vmem:[%s243 + $0x8] sm:$0xff]
      %v403 = vld [vmem:[%s243 + $0x10] sm:$0xff]
      %v404 = vld [vmem:[%s243 + $0x18] sm:$0xff]
      %v405 = vld [vmem:[%s243 + $0x20] sm:$0xff]
      %v406 = vld [vmem:[%s243 + $0x28] sm:$0xff]
      %v407 = vld [vmem:[%s243 + $0x30] sm:$0xff]
      %v408 = vld [vmem:[%s243 + $0x38] sm:$0xff]
      %v409 = vld [vmem:[%s243 + $0x40] sm:$0xff]
      %v410 = vld [vmem:[%s243 + $0x48] sm:$0xff]
      %v411 = vld [vmem:[%s243 + $0x50] sm:$0xff]
      %v412 = vld [vmem:[%s243 + $0x58] sm:$0xff]
      %v413 = vld [vmem:[%s243 + $0x60] sm:$0xff]
      %v414 = vld [vmem:[%s243 + $0x68] sm:$0xff]
      %v415 = vld [vmem:[%s243 + $0x70] sm:$0xff]
      %v416 = vld [vmem:[%s243 + $0x78] sm:$0xff]
      %v417 = vld [vmem:[%s243 + $0x80] sm:$0xff]
      %v418 = vld [vmem:[%s243 + $0x88] sm:$0xff]
      %v419 = vld [vmem:[%s243 + $0x90] sm:$0xff]
      %v420 = vld [vmem:[%s243 + $0x98] sm:$0xff]
      %v421 = vld [vmem:[%s243 + $0xa0] sm:$0xff]
      %v422 = vld [vmem:[%s243 + $0xa8] sm:$0xff]
      %v423 = vld [vmem:[%s243 + $0xb0] sm:$0xff]
      %v424 = vld [vmem:[%s243 + $0xb8] sm:$0xff]
      %v425 = vld [vmem:[%s243 + $0xc0] sm:$0xff]
      %v426 = vld [vmem:[%s243 + $0xc8] sm:$0xff]
      %v427 = vld [vmem:[%s243 + $0xd0] sm:$0xff]
      %v428 = vld [vmem:[%s243 + $0xd8] sm:$0xff]
      %v429 = vld [vmem:[%s243 + $0xe0] sm:$0xff]
      %v430 = vld [vmem:[%s243 + $0xe8] sm:$0xff]
      %v431 = vld [vmem:[%s243 + $0xf0] sm:$0xff]
      %v432 = vld [vmem:[%s243 + $0xf8] sm:$0xff]
      %v433 = vld [vmem:[%s243 + $0x100] sm:$0xff]
      %v434 = vld [vmem:[%s243 + $0x108] sm:$0xff]
      %v435 = vld [vmem:[%s243 + $0x110] sm:$0xff]
      %v436 = vld [vmem:[%s243 + $0x118] sm:$0xff]
      %v437 = vld [vmem:[%s243 + $0x120] sm:$0xff]
      %v438 = vld [vmem:[%s243 + $0x128] sm:$0xff]
      %v439 = vld [vmem:[%s243 + $0x130] sm:$0xff]
      %v440 = vld [vmem:[%s243 + $0x138] sm:$0xff]
      %v441 = vld [vmem:[%s243 + $0x140] sm:$0xff]
      %v442 = vld [vmem:[%s243 + $0x148] sm:$0xff]
      %v443 = vld [vmem:[%s243 + $0x150] sm:$0xff]
      %v444 = vld [vmem:[%s243 + $0x158] sm:$0xff]
      %v445 = vld [vmem:[%s243 + $0x160] sm:$0xff]
      %v446 = vld [vmem:[%s243 + $0x168] sm:$0xff]
      %v447 = vld [vmem:[%s243 + $0x170] sm:$0xff]
      %v448 = vld [vmem:[%s243 + $0x178] sm:$0xff]
      %v449 = vld [vmem:[%s243 + $0x180] sm:$0xff]
      %v450 = vld [vmem:[%s243 + $0x188] sm:$0xff]
      %v451 = vld [vmem:[%s243 + $0x190] sm:$0xff]
      %v452 = vld [vmem:[%s243 + $0x198] sm:$0xff]
      %v453 = vld [vmem:[%s243 + $0x1a0] sm:$0xff]
      %v454 = vld [vmem:[%s243 + $0x1a8] sm:$0xff]
      %v455 = vld [vmem:[%s243 + $0x1b0] sm:$0xff]
      %v456 = vld [vmem:[%s243 + $0x1b8] sm:$0xff]
      %v457 = vld [vmem:[%s243 + $0x1c0] sm:$0xff]
      %v458 = vld [vmem:[%s243 + $0x1c8] sm:$0xff]
      %v459 = vld [vmem:[%s243 + $0x1d0] sm:$0xff]
      %v460 = vld [vmem:[%s243 + $0x1d8] sm:$0xff]
      %v461 = vld [vmem:[%s243 + $0x1e0] sm:$0xff]
      %v462 = vld [vmem:[%s243 + $0x1e8] sm:$0xff]
      %v463 = vld [vmem:[%s243 + $0x1f0] sm:$0xff]
      %v464 = vld [vmem:[%s243 + $0x1f8] sm:$0xff]
      %v465 = vld [vmem:[%s253] sm:$0xf]
      %v466 = vld [vmem:[%s253 + $0x4] sm:$0xf]
      %v467 = vld [vmem:[%s253 + $0x8] sm:$0xf]
      %v468 = vld [vmem:[%s253 + $0xc] sm:$0xf]
      %v469 = vld [vmem:[%s253 + $0x10] sm:$0xf]
      %v470 = vld [vmem:[%s253 + $0x14] sm:$0xf]
      %v471 = vld [vmem:[%s253 + $0x18] sm:$0xf]
      %v472 = vld [vmem:[%s253 + $0x1c] sm:$0xf]
      %v473 = vld [vmem:[%s253 + $0x20] sm:$0xf]
      %v474 = vld [vmem:[%s253 + $0x24] sm:$0xf]
      %v475 = vld [vmem:[%s253 + $0x28] sm:$0xf]
      %v476 = vld [vmem:[%s253 + $0x2c] sm:$0xf]
      %v477 = vld [vmem:[%s253 + $0x30] sm:$0xf]
      %v478 = vld [vmem:[%s253 + $0x34] sm:$0xf]
      %v479 = vld [vmem:[%s253 + $0x38] sm:$0xf]
      %v480 = vld [vmem:[%s253 + $0x3c] sm:$0xf]
      %v481 = vld [vmem:[%s253 + $0x40] sm:$0xf]
      %v482 = vld [vmem:[%s253 + $0x44] sm:$0xf]
      %v483 = vld [vmem:[%s253 + $0x48] sm:$0x3]
      %v548 = vunpack.c.l.b16 %v401
      %v549 = vunpack.c.h.b16 %v401
      %v550 = vunpack.c.l.b16 %v402
      %v551 = vunpack.c.h.b16 %v402
      %v552 = vunpack.c.l.b16 %v403
      %v553 = vunpack.c.h.b16 %v403
      %v554 = vunpack.c.l.b16 %v404
      %v555 = vunpack.c.h.b16 %v404
      %v556 = vunpack.c.l.b16 %v405
      %v557 = vunpack.c.h.b16 %v405
      %v558 = vunpack.c.l.b16 %v406
      %v559 = vunpack.c.h.b16 %v406
      %v560 = vunpack.c.l.b16 %v407
      %v561 = vunpack.c.h.b16 %v407
      %v562 = vunpack.c.l.b16 %v408
      %v563 = vunpack.c.h.b16 %v408
      %v564 = vunpack.c.l.b16 %v409
      %v565 = vunpack.c.h.b16 %v409
      %v566 = vunpack.c.l.b16 %v410
      %v567 = vunpack.c.h.b16 %v410
      %v568 = vunpack.c.l.b16 %v411
      %v569 = vunpack.c.h.b16 %v411
      %v570 = vunpack.c.l.b16 %v412
      %v571 = vunpack.c.h.b16 %v412
      %v572 = vunpack.c.l.b16 %v413
      %v573 = vunpack.c.h.b16 %v413
      %v574 = vunpack.c.l.b16 %v414
      %v575 = vunpack.c.h.b16 %v414
      %v576 = vunpack.c.l.b16 %v415
      %v577 = vunpack.c.h.b16 %v415
      %v578 = vunpack.c.l.b16 %v416
      %v579 = vunpack.c.h.b16 %v416
      %v580 = vunpack.c.l.b16 %v417
      %v581 = vunpack.c.h.b16 %v417
      %v582 = vunpack.c.l.b16 %v418
      %v583 = vunpack.c.h.b16 %v418
      %v584 = vunpack.c.l.b16 %v419
      %v585 = vunpack.c.h.b16 %v419
      %v586 = vunpack.c.l.b16 %v420
      %v587 = vunpack.c.h.b16 %v420
      %v588 = vunpack.c.l.b16 %v421
      %v589 = vunpack.c.h.b16 %v421
      %v590 = vunpack.c.l.b16 %v422
      %v591 = vunpack.c.h.b16 %v422
      %v592 = vunpack.c.l.b16 %v423
      %v593 = vunpack.c.h.b16 %v423
      %v594 = vunpack.c.l.b16 %v424
      %v595 = vunpack.c.h.b16 %v424
      %v596 = vunpack.c.l.b16 %v425
      %v597 = vunpack.c.h.b16 %v425
      %v598 = vunpack.c.l.b16 %v426
      %v599 = vunpack.c.h.b16 %v426
      %v600 = vunpack.c.l.b16 %v427
      %v601 = vunpack.c.h.b16 %v427
      %v602 = vunpack.c.l.b16 %v428
      %v603 = vunpack.c.h.b16 %v428
      %v604 = vunpack.c.l.b16 %v429
      %v605 = vunpack.c.h.b16 %v429
      %v606 = vunpack.c.l.b16 %v430
      %v607 = vunpack.c.h.b16 %v430
      %v608 = vunpack.c.l.b16 %v431
      %v609 = vunpack.c.h.b16 %v431
      %v610 = vunpack.c.l.b16 %v432
      %v611 = vunpack.c.h.b16 %v432
      %v612 = vunpack.c.l.b16 %v433
      %v613 = vunpack.c.h.b16 %v433
      %v614 = vunpack.c.l.b16 %v434
      %v615 = vunpack.c.h.b16 %v434
      %v616 = vunpack.c.l.b16 %v435
      %v617 = vunpack.c.h.b16 %v435
      %v618 = vunpack.c.l.b16 %v436
      %v619 = vunpack.c.h.b16 %v436
      %v620 = vunpack.c.l.b16 %v437
      %v621 = vunpack.c.h.b16 %v437
      %v622 = vunpack.c.l.b16 %v438
      %v623 = vunpack.c.h.b16 %v438
      %v624 = vunpack.c.l.b16 %v439
      %v625 = vunpack.c.h.b16 %v439
      %v626 = vunpack.c.l.b16 %v440
      %v627 = vunpack.c.h.b16 %v440
      %v628 = vunpack.c.l.b16 %v441
      %v629 = vunpack.c.h.b16 %v441
      %v630 = vunpack.c.l.b16 %v442
      %v631 = vunpack.c.h.b16 %v442
      %v632 = vunpack.c.l.b16 %v443
      %v633 = vunpack.c.h.b16 %v443
      %v634 = vunpack.c.l.b16 %v444
      %v635 = vunpack.c.h.b16 %v444
      %v636 = vunpack.c.l.b16 %v445
      %v637 = vunpack.c.h.b16 %v445
      %v638 = vunpack.c.l.b16 %v446
      %v639 = vunpack.c.h.b16 %v446
      %v640 = vunpack.c.l.b16 %v447
      %v641 = vunpack.c.h.b16 %v447
      %v642 = vunpack.c.l.b16 %v448
      %v643 = vunpack.c.h.b16 %v448
      %v644 = vunpack.c.l.b16 %v449
      %v645 = vunpack.c.h.b16 %v449
      %v646 = vunpack.c.l.b16 %v450
      %v647 = vunpack.c.h.b16 %v450
      %v648 = vunpack.c.l.b16 %v451
      %v649 = vunpack.c.h.b16 %v451
      %v650 = vunpack.c.l.b16 %v452
      %v651 = vunpack.c.h.b16 %v452
      %v652 = vunpack.c.l.b16 %v453
      %v653 = vunpack.c.h.b16 %v453
      %v654 = vunpack.c.l.b16 %v454
      %v655 = vunpack.c.h.b16 %v454
      %v656 = vunpack.c.l.b16 %v455
      %v657 = vunpack.c.h.b16 %v455
      %v658 = vunpack.c.l.b16 %v456
      %v659 = vunpack.c.h.b16 %v456
      %v660 = vunpack.c.l.b16 %v457
      %v661 = vunpack.c.h.b16 %v457
      %v662 = vunpack.c.l.b16 %v458
      %v663 = vunpack.c.h.b16 %v458
      %v664 = vunpack.c.l.b16 %v459
      %v665 = vunpack.c.h.b16 %v459
      %v666 = vunpack.c.l.b16 %v460
      %v667 = vunpack.c.h.b16 %v460
      %v668 = vunpack.c.l.b16 %v461
      %v669 = vunpack.c.h.b16 %v461
      %v670 = vunpack.c.l.b16 %v462
      %v671 = vunpack.c.h.b16 %v462
      %v672 = vunpack.c.l.b16 %v463
      %v673 = vunpack.c.h.b16 %v463
      %v674 = vunpack.c.l.b16 %v464
      %v675 = vunpack.c.h.b16 %v464
      %v676 = vpack.c.b16 %v550, %v548
      %v677 = vpack.c.b16 %v551, %v549
      %v678 = vpack.c.b16 %v554, %v552
      %v679 = vpack.c.b16 %v555, %v553
      %v680 = vpack.c.b16 %v558, %v556
      %v681 = vpack.c.b16 %v559, %v557
      %v682 = vpack.c.b16 %v562, %v560
      %v683 = vpack.c.b16 %v563, %v561
      %v684 = vpack.c.b16 %v566, %v564
      %v685 = vpack.c.b16 %v567, %v565
      %v686 = vpack.c.b16 %v570, %v568
      %v687 = vpack.c.b16 %v571, %v569
      %v688 = vpack.c.b16 %v574, %v572
      %v689 = vpack.c.b16 %v575, %v573
      %v690 = vpack.c.b16 %v578, %v576
      %v691 = vpack.c.b16 %v579, %v577
      %v692 = vpack.c.b16 %v582, %v580
      %v693 = vpack.c.b16 %v583, %v581
      %v694 = vpack.c.b16 %v586, %v584
      %v695 = vpack.c.b16 %v587, %v585
      %v696 = vpack.c.b16 %v590, %v588
      %v697 = vpack.c.b16 %v591, %v589
      %v698 = vpack.c.b16 %v594, %v592
      %v699 = vpack.c.b16 %v595, %v593
      %v700 = vpack.c.b16 %v598, %v596
      %v701 = vpack.c.b16 %v599, %v597
      %v702 = vpack.c.b16 %v602, %v600
      %v703 = vpack.c.b16 %v603, %v601
      %v704 = vpack.c.b16 %v606, %v604
      %v705 = vpack.c.b16 %v607, %v605
      %v706 = vpack.c.b16 %v610, %v608
      %v707 = vpack.c.b16 %v611, %v609
      %v708 = vpack.c.b16 %v614, %v612
      %v709 = vpack.c.b16 %v615, %v613
      %v710 = vpack.c.b16 %v618, %v616
      %v711 = vpack.c.b16 %v619, %v617
      %v712 = vpack.c.b16 %v622, %v620
      %v713 = vpack.c.b16 %v623, %v621
      %v714 = vpack.c.b16 %v626, %v624
      %v715 = vpack.c.b16 %v627, %v625
      %v716 = vpack.c.b16 %v630, %v628
      %v717 = vpack.c.b16 %v631, %v629
      %v718 = vpack.c.b16 %v634, %v632
      %v719 = vpack.c.b16 %v635, %v633
      %v720 = vpack.c.b16 %v638, %v636
      %v721 = vpack.c.b16 %v639, %v637
      %v722 = vpack.c.b16 %v642, %v640
      %v723 = vpack.c.b16 %v643, %v641
      %v724 = vpack.c.b16 %v646, %v644
      %v725 = vpack.c.b16 %v647, %v645
      %v726 = vpack.c.b16 %v650, %v648
      %v727 = vpack.c.b16 %v651, %v649
      %v728 = vpack.c.b16 %v654, %v652
      %v729 = vpack.c.b16 %v655, %v653
      %v730 = vpack.c.b16 %v658, %v656
      %v731 = vpack.c.b16 %v659, %v657
      %v732 = vpack.c.b16 %v662, %v660
      %v733 = vpack.c.b16 %v663, %v661
      %v734 = vpack.c.b16 %v666, %v664
      %v735 = vpack.c.b16 %v667, %v665
      %v736 = vpack.c.b16 %v670, %v668
      %v737 = vpack.c.b16 %v671, %v669
      %v738 = vpack.c.b16 %v674, %v672
      %v739 = vpack.c.b16 %v675, %v673
      %v791 = vunpack.c.l.b16 %v465
      %v792 = vunpack.c.l.b16 %v466
      %v793 = vunpack.c.l.b16 %v467
      %v794 = vunpack.c.l.b16 %v468
      %v795 = vunpack.c.l.b16 %v469
      %v796 = vunpack.c.l.b16 %v470
      %v797 = vunpack.c.l.b16 %v471
      %v798 = vunpack.c.l.b16 %v472
      %v799 = vunpack.c.l.b16 %v473
      %v800 = vunpack.c.l.b16 %v474
      %v801 = vunpack.c.l.b16 %v475
      %v802 = vunpack.c.l.b16 %v476
      %v803 = vunpack.c.l.b16 %v477
      %v804 = vunpack.c.l.b16 %v478
      %v805 = vunpack.c.l.b16 %v479
      %v806 = vunpack.c.l.b16 %v480
      %v807 = vunpack.c.l.b16 %v481
      %v808 = vunpack.c.l.b16 %v482
      %v809 = vunpack.c.l.b16 %v483
      %v810 = vpack.c.b16 %v792, %v791
      %v811 = vpack.c.b16 %v794, %v793
      %v812 = vpack.c.b16 %v796, %v795
      %v813 = vpack.c.b16 %v798, %v797
      %v814 = vpack.c.b16 %v800, %v799
      %v815 = vpack.c.b16 %v802, %v801
      %v816 = vpack.c.b16 %v804, %v803
      %v817 = vpack.c.b16 %v806, %v805
      %v818 = vpack.c.b16 %v808, %v807
      %v819 = vpack.c.b16 %v809, %v809
      %vm829 = vcmask 154624
      %v831 = vsel %vm829, %v677, 0
      %v834 = vsel %vm829, %v679, 0
      %v837 = vsel %vm829, %v681, 0
      %v840 = vsel %vm829, %v683, 0
      %v843 = vsel %vm829, %v685, 0
      %v846 = vsel %vm829, %v687, 0
      %v849 = vsel %vm829, %v689, 0
      %v852 = vsel %vm829, %v691, 0
      %v855 = vsel %vm829, %v693, 0
      %v858 = vsel %vm829, %v695, 0
      %v861 = vsel %vm829, %v697, 0
      %v864 = vsel %vm829, %v699, 0
      %v867 = vsel %vm829, %v701, 0
      %v870 = vsel %vm829, %v703, 0
      %v873 = vsel %vm829, %v705, 0
      %v876 = vsel %vm829, %v707, 0
      %v879 = vsel %vm829, %v709, 0
      %v882 = vsel %vm829, %v711, 0
      %v885 = vsel %vm829, %v713, 0
      %v888 = vsel %vm829, %v715, 0
      %v891 = vsel %vm829, %v717, 0
      %v894 = vsel %vm829, %v719, 0
      %v897 = vsel %vm829, %v721, 0
      %v900 = vsel %vm829, %v723, 0
      %v903 = vsel %vm829, %v725, 0
      %v906 = vsel %vm829, %v727, 0
      %v909 = vsel %vm829, %v729, 0
      %v912 = vsel %vm829, %v731, 0
      %v915 = vsel %vm829, %v733, 0
      %v918 = vsel %vm829, %v735, 0
      %v921 = vsel %vm829, %v737, 0
      %v924 = vsel %vm829, %v739, 0
      %vm926 = vcmask 1040384
      %vm927 = vcmask 1041408
      %v928 = vsel %vm926, 4294967295, 65535
      %v929 = vsel %vm927, %v928, 0
      %v931 = vand.u32 %v819, %v929
      %933 = vmatpush.bf16.msra.mxu0 %v817
      %934 = vmatpush.bf16.msra.mxu0 %v816
      %935 = vmatpush.bf16.msra.mxu0 %v815
      %936 = vmatpush.bf16.msra.mxu0 %v814
      %937 = vmatpush.bf16.msra.mxu0 %v813
      %938 = vmatpush.bf16.msra.mxu0 %v812
      %939 = vmatpush.bf16.msra.mxu0 %v811
      %940 = vmatpush.bf16.msra.mxu0 %v810
      %941 = vmatmul.bf16.gmra.mxu0 %v676
      %v942 = vpop.f32.mrf.mxu0
      %v943 = vadd.f32 0.0, %v942
      %v944 = vpop.f32.mrf.mxu0
      %v945 = vadd.f32 0.0, %v944
      %946 = vmatmul.bf16.gmra.mxu0 %v678
      %v947 = vpop.f32.mrf.mxu0
      %v948 = vadd.f32 0.0, %v947
      %v949 = vpop.f32.mrf.mxu0
      %v950 = vadd.f32 0.0, %v949
      %951 = vmatmul.bf16.gmra.mxu0 %v680
      %v952 = vpop.f32.mrf.mxu0
      %v953 = vadd.f32 0.0, %v952
      %v954 = vpop.f32.mrf.mxu0
      %v955 = vadd.f32 0.0, %v954
      %956 = vmatmul.bf16.gmra.mxu0 %v682
      %v957 = vpop.f32.mrf.mxu0
      %v958 = vadd.f32 0.0, %v957
      %v959 = vpop.f32.mrf.mxu0
      %v960 = vadd.f32 0.0, %v959
      %961 = vmatmul.bf16.gmra.mxu0 %v684
      %v962 = vpop.f32.mrf.mxu0
      %v963 = vadd.f32 0.0, %v962
      %v964 = vpop.f32.mrf.mxu0
      %v965 = vadd.f32 0.0, %v964
      %966 = vmatmul.bf16.gmra.mxu0 %v686
      %v967 = vpop.f32.mrf.mxu0
      %v968 = vadd.f32 0.0, %v967
      %v969 = vpop.f32.mrf.mxu0
      %v970 = vadd.f32 0.0, %v969
      %971 = vmatmul.bf16.gmra.mxu0 %v688
      %v972 = vpop.f32.mrf.mxu0
      %v973 = vadd.f32 0.0, %v972
      %v974 = vpop.f32.mrf.mxu0
      %v975 = vadd.f32 0.0, %v974
      %976 = vmatmul.bf16.gmra.mxu0 %v690
      %v977 = vpop.f32.mrf.mxu0
      %v978 = vadd.f32 0.0, %v977
      %v979 = vpop.f32.mrf.mxu0
      %v980 = vadd.f32 0.0, %v979
      %981 = vmatmul.bf16.gmra.mxu0 %v692
      %v982 = vpop.f32.mrf.mxu0
      %v983 = vadd.f32 0.0, %v982
      %v984 = vpop.f32.mrf.mxu0
      %v985 = vadd.f32 0.0, %v984
      %986 = vmatmul.bf16.gmra.mxu0 %v694
      %v987 = vpop.f32.mrf.mxu0
      %v988 = vadd.f32 0.0, %v987
      %v989 = vpop.f32.mrf.mxu0
      %v990 = vadd.f32 0.0, %v989
      %991 = vmatmul.bf16.gmra.mxu0 %v696
      %v992 = vpop.f32.mrf.mxu0
      %v993 = vadd.f32 0.0, %v992
      %v994 = vpop.f32.mrf.mxu0
      %v995 = vadd.f32 0.0, %v994
      %996 = vmatmul.bf16.gmra.mxu0 %v698
      %v997 = vpop.f32.mrf.mxu0
      %v998 = vadd.f32 0.0, %v997
      %v999 = vpop.f32.mrf.mxu0
      %v1000 = vadd.f32 0.0, %v999
      %1001 = vmatmul.bf16.gmra.mxu0 %v700
      %v1002 = vpop.f32.mrf.mxu0
      %v1003 = vadd.f32 0.0, %v1002
      %v1004 = vpop.f32.mrf.mxu0
      %v1005 = vadd.f32 0.0, %v1004
      %1006 = vmatmul.bf16.gmra.mxu0 %v702
      %v1007 = vpop.f32.mrf.mxu0
      %v1008 = vadd.f32 0.0, %v1007
      %v1009 = vpop.f32.mrf.mxu0
      %v1010 = vadd.f32 0.0, %v1009
      %1011 = vmatmul.bf16.gmra.mxu0 %v704
      %v1012 = vpop.f32.mrf.mxu0
      %v1013 = vadd.f32 0.0, %v1012
      %v1014 = vpop.f32.mrf.mxu0
      %v1015 = vadd.f32 0.0, %v1014
      %1016 = vmatmul.bf16.gmra.mxu0 %v706
      %v1017 = vpop.f32.mrf.mxu0
      %v1018 = vadd.f32 0.0, %v1017
      %v1019 = vpop.f32.mrf.mxu0
      %v1020 = vadd.f32 0.0, %v1019
      %1021 = vmatmul.bf16.gmra.mxu0 %v708
      %v1022 = vpop.f32.mrf.mxu0
      %v1023 = vadd.f32 0.0, %v1022
      %v1024 = vpop.f32.mrf.mxu0
      %v1025 = vadd.f32 0.0, %v1024
      %1026 = vmatmul.bf16.gmra.mxu0 %v710
      %v1027 = vpop.f32.mrf.mxu0
      %v1028 = vadd.f32 0.0, %v1027
      %v1029 = vpop.f32.mrf.mxu0
      %v1030 = vadd.f32 0.0, %v1029
      %1031 = vmatmul.bf16.gmra.mxu0 %v712
      %v1032 = vpop.f32.mrf.mxu0
      %v1033 = vadd.f32 0.0, %v1032
      %v1034 = vpop.f32.mrf.mxu0
      %v1035 = vadd.f32 0.0, %v1034
      %1036 = vmatmul.bf16.gmra.mxu0 %v714
      %v1037 = vpop.f32.mrf.mxu0
      %v1038 = vadd.f32 0.0, %v1037
      %v1039 = vpop.f32.mrf.mxu0
      %v1040 = vadd.f32 0.0, %v1039
      %1041 = vmatmul.bf16.gmra.mxu0 %v716
      %v1042 = vpop.f32.mrf.mxu0
      %v1043 = vadd.f32 0.0, %v1042
      %v1044 = vpop.f32.mrf.mxu0
      %v1045 = vadd.f32 0.0, %v1044
      %1046 = vmatmul.bf16.gmra.mxu0 %v718
      %v1047 = vpop.f32.mrf.mxu0
      %v1048 = vadd.f32 0.0, %v1047
      %v1049 = vpop.f32.mrf.mxu0
      %v1050 = vadd.f32 0.0, %v1049
      %1051 = vmatmul.bf16.gmra.mxu0 %v720
      %v1052 = vpop.f32.mrf.mxu0
      %v1053 = vadd.f32 0.0, %v1052
      %v1054 = vpop.f32.mrf.mxu0
      %v1055 = vadd.f32 0.0, %v1054
      %1056 = vmatmul.bf16.gmra.mxu0 %v722
      %v1057 = vpop.f32.mrf.mxu0
      %v1058 = vadd.f32 0.0, %v1057
      %v1059 = vpop.f32.mrf.mxu0
      %v1060 = vadd.f32 0.0, %v1059
      %1061 = vmatmul.bf16.gmra.mxu0 %v724
      %v1062 = vpop.f32.mrf.mxu0
      %v1063 = vadd.f32 0.0, %v1062
      %v1064 = vpop.f32.mrf.mxu0
      %v1065 = vadd.f32 0.0, %v1064
      %1066 = vmatmul.bf16.gmra.mxu0 %v726
      %v1067 = vpop.f32.mrf.mxu0
      %v1068 = vadd.f32 0.0, %v1067
      %v1069 = vpop.f32.mrf.mxu0
      %v1070 = vadd.f32 0.0, %v1069
      %1071 = vmatmul.bf16.gmra.mxu0 %v728
      %v1072 = vpop.f32.mrf.mxu0
      %v1073 = vadd.f32 0.0, %v1072
      %v1074 = vpop.f32.mrf.mxu0
      %v1075 = vadd.f32 0.0, %v1074
      %1076 = vmatmul.bf16.gmra.mxu0 %v730
      %v1077 = vpop.f32.mrf.mxu0
      %v1078 = vadd.f32 0.0, %v1077
      %v1079 = vpop.f32.mrf.mxu0
      %v1080 = vadd.f32 0.0, %v1079
      %1081 = vmatmul.bf16.gmra.mxu0 %v732
      %v1082 = vpop.f32.mrf.mxu0
      %v1083 = vadd.f32 0.0, %v1082
      %v1084 = vpop.f32.mrf.mxu0
      %v1085 = vadd.f32 0.0, %v1084
      %1086 = vmatmul.bf16.gmra.mxu0 %v734
      %v1087 = vpop.f32.mrf.mxu0
      %v1088 = vadd.f32 0.0, %v1087
      %v1089 = vpop.f32.mrf.mxu0
      %v1090 = vadd.f32 0.0, %v1089
      %1091 = vmatmul.bf16.gmra.mxu0 %v736
      %v1092 = vpop.f32.mrf.mxu0
      %v1093 = vadd.f32 0.0, %v1092
      %v1094 = vpop.f32.mrf.mxu0
      %v1095 = vadd.f32 0.0, %v1094
      %1096 = vmatmul.bf16.gmra.mxu0 %v738
      %v1097 = vpop.f32.mrf.mxu0
      %v1098 = vadd.f32 0.0, %v1097
      %v1099 = vpop.f32.mrf.mxu0
      %v1100 = vadd.f32 0.0, %v1099
      %1101 = vdwg.mxu0
      %1102 = vmatpush.bf16.msra.mxu0 0
      %1103 = vmatpush.bf16.msra.mxu0 0
      %1104 = vmatpush.bf16.msra.mxu0 0
      %1105 = vmatpush.bf16.msra.mxu0 0
      %1106 = vmatpush.bf16.msra.mxu0 0
      %1107 = vmatpush.bf16.msra.mxu0 0
      %1108 = vmatpush.bf16.msra.mxu0 %v931
      %1109 = vmatpush.bf16.msra.mxu0 %v818
      %1110 = vmatmul.bf16.gmra.mxu0 %v831
      %v1111 = vpop.f32.mrf.mxu0
      %v1112 = vadd.f32 %v943, %v1111
      %v1113 = vpop.f32.mrf.mxu0
      %v1114 = vadd.f32 %v945, %v1113
      %1115 = vmatmul.bf16.gmra.mxu0 %v834
      %v1116 = vpop.f32.mrf.mxu0
      %v1117 = vadd.f32 %v948, %v1116
      %v1118 = vpop.f32.mrf.mxu0
      %v1119 = vadd.f32 %v950, %v1118
      %1120 = vmatmul.bf16.gmra.mxu0 %v837
      %v1121 = vpop.f32.mrf.mxu0
      %v1122 = vadd.f32 %v953, %v1121
      %v1123 = vpop.f32.mrf.mxu0
      %v1124 = vadd.f32 %v955, %v1123
      %1125 = vmatmul.bf16.gmra.mxu0 %v840
      %v1126 = vpop.f32.mrf.mxu0
      %v1127 = vadd.f32 %v958, %v1126
      %v1128 = vpop.f32.mrf.mxu0
      %v1129 = vadd.f32 %v960, %v1128
      %1130 = vmatmul.bf16.gmra.mxu0 %v843
      %v1131 = vpop.f32.mrf.mxu0
      %v1132 = vadd.f32 %v963, %v1131
      %v1133 = vpop.f32.mrf.mxu0
      %v1134 = vadd.f32 %v965, %v1133
      %1135 = vmatmul.bf16.gmra.mxu0 %v846
      %v1136 = vpop.f32.mrf.mxu0
      %v1137 = vadd.f32 %v968, %v1136
      %v1138 = vpop.f32.mrf.mxu0
      %v1139 = vadd.f32 %v970, %v1138
      %1140 = vmatmul.bf16.gmra.mxu0 %v849
      %v1141 = vpop.f32.mrf.mxu0
      %v1142 = vadd.f32 %v973, %v1141
      %v1143 = vpop.f32.mrf.mxu0
      %v1144 = vadd.f32 %v975, %v1143
      %1145 = vmatmul.bf16.gmra.mxu0 %v852
      %v1146 = vpop.f32.mrf.mxu0
      %v1147 = vadd.f32 %v978, %v1146
      %v1148 = vpop.f32.mrf.mxu0
      %v1149 = vadd.f32 %v980, %v1148
      %1150 = vmatmul.bf16.gmra.mxu0 %v855
      %v1151 = vpop.f32.mrf.mxu0
      %v1152 = vadd.f32 %v983, %v1151
      %v1153 = vpop.f32.mrf.mxu0
      %v1154 = vadd.f32 %v985, %v1153
      %1155 = vmatmul.bf16.gmra.mxu0 %v858
      %v1156 = vpop.f32.mrf.mxu0
      %v1157 = vadd.f32 %v988, %v1156
      %v1158 = vpop.f32.mrf.mxu0
      %v1159 = vadd.f32 %v990, %v1158
      %1160 = vmatmul.bf16.gmra.mxu0 %v861
      %v1161 = vpop.f32.mrf.mxu0
      %v1162 = vadd.f32 %v993, %v1161
      %v1163 = vpop.f32.mrf.mxu0
      %v1164 = vadd.f32 %v995, %v1163
      %1165 = vmatmul.bf16.gmra.mxu0 %v864
      %v1166 = vpop.f32.mrf.mxu0
      %v1167 = vadd.f32 %v998, %v1166
      %v1168 = vpop.f32.mrf.mxu0
      %v1169 = vadd.f32 %v1000, %v1168
      %1170 = vmatmul.bf16.gmra.mxu0 %v867
      %v1171 = vpop.f32.mrf.mxu0
      %v1172 = vadd.f32 %v1003, %v1171
      %v1173 = vpop.f32.mrf.mxu0
      %v1174 = vadd.f32 %v1005, %v1173
      %1175 = vmatmul.bf16.gmra.mxu0 %v870
      %v1176 = vpop.f32.mrf.mxu0
      %v1177 = vadd.f32 %v1008, %v1176
      %v1178 = vpop.f32.mrf.mxu0
      %v1179 = vadd.f32 %v1010, %v1178
      %1180 = vmatmul.bf16.gmra.mxu0 %v873
      %v1181 = vpop.f32.mrf.mxu0
      %v1182 = vadd.f32 %v1013, %v1181
      %v1183 = vpop.f32.mrf.mxu0
      %v1184 = vadd.f32 %v1015, %v1183
      %1185 = vmatmul.bf16.gmra.mxu0 %v876
      %v1186 = vpop.f32.mrf.mxu0
      %v1187 = vadd.f32 %v1018, %v1186
      %v1188 = vpop.f32.mrf.mxu0
      %v1189 = vadd.f32 %v1020, %v1188
      %1190 = vmatmul.bf16.gmra.mxu0 %v879
      %v1191 = vpop.f32.mrf.mxu0
      %v1192 = vadd.f32 %v1023, %v1191
      %v1193 = vpop.f32.mrf.mxu0
      %v1194 = vadd.f32 %v1025, %v1193
      %1195 = vmatmul.bf16.gmra.mxu0 %v882
      %v1196 = vpop.f32.mrf.mxu0
      %v1197 = vadd.f32 %v1028, %v1196
      %v1198 = vpop.f32.mrf.mxu0
      %v1199 = vadd.f32 %v1030, %v1198
      %1200 = vmatmul.bf16.gmra.mxu0 %v885
      %v1201 = vpop.f32.mrf.mxu0
      %v1202 = vadd.f32 %v1033, %v1201
      %v1203 = vpop.f32.mrf.mxu0
      %v1204 = vadd.f32 %v1035, %v1203
      %1205 = vmatmul.bf16.gmra.mxu0 %v888
      %v1206 = vpop.f32.mrf.mxu0
      %v1207 = vadd.f32 %v1038, %v1206
      %v1208 = vpop.f32.mrf.mxu0
      %v1209 = vadd.f32 %v1040, %v1208
      %1210 = vmatmul.bf16.gmra.mxu0 %v891
      %v1211 = vpop.f32.mrf.mxu0
      %v1212 = vadd.f32 %v1043, %v1211
      %v1213 = vpop.f32.mrf.mxu0
      %v1214 = vadd.f32 %v1045, %v1213
      %1215 = vmatmul.bf16.gmra.mxu0 %v894
      %v1216 = vpop.f32.mrf.mxu0
      %v1217 = vadd.f32 %v1048, %v1216
      %v1218 = vpop.f32.mrf.mxu0
      %v1219 = vadd.f32 %v1050, %v1218
      %1220 = vmatmul.bf16.gmra.mxu0 %v897
      %v1221 = vpop.f32.mrf.mxu0
      %v1222 = vadd.f32 %v1053, %v1221
      %v1223 = vpop.f32.mrf.mxu0
      %v1224 = vadd.f32 %v1055, %v1223
      %1225 = vmatmul.bf16.gmra.mxu0 %v900
      %v1226 = vpop.f32.mrf.mxu0
      %v1227 = vadd.f32 %v1058, %v1226
      %v1228 = vpop.f32.mrf.mxu0
      %v1229 = vadd.f32 %v1060, %v1228
      %1230 = vmatmul.bf16.gmra.mxu0 %v903
      %v1231 = vpop.f32.mrf.mxu0
      %v1232 = vadd.f32 %v1063, %v1231
      %v1233 = vpop.f32.mrf.mxu0
      %v1234 = vadd.f32 %v1065, %v1233
      %1235 = vmatmul.bf16.gmra.mxu0 %v906
      %v1236 = vpop.f32.mrf.mxu0
      %v1237 = vadd.f32 %v1068, %v1236
      %v1238 = vpop.f32.mrf.mxu0
      %v1239 = vadd.f32 %v1070, %v1238
      %1240 = vmatmul.bf16.gmra.mxu0 %v909
      %v1241 = vpop.f32.mrf.mxu0
      %v1242 = vadd.f32 %v1073, %v1241
      %v1243 = vpop.f32.mrf.mxu0
      %v1244 = vadd.f32 %v1075, %v1243
      %1245 = vmatmul.bf16.gmra.mxu0 %v912
      %v1246 = vpop.f32.mrf.mxu0
      %v1247 = vadd.f32 %v1078, %v1246
      %v1248 = vpop.f32.mrf.mxu0
      %v1249 = vadd.f32 %v1080, %v1248
      %1250 = vmatmul.bf16.gmra.mxu0 %v915
      %v1251 = vpop.f32.mrf.mxu0
      %v1252 = vadd.f32 %v1083, %v1251
      %v1253 = vpop.f32.mrf.mxu0
      %v1254 = vadd.f32 %v1085, %v1253
      %1255 = vmatmul.bf16.gmra.mxu0 %v918
      %v1256 = vpop.f32.mrf.mxu0
      %v1257 = vadd.f32 %v1088, %v1256
      %v1258 = vpop.f32.mrf.mxu0
      %v1259 = vadd.f32 %v1090, %v1258
      %1260 = vmatmul.bf16.gmra.mxu0 %v921
      %v1261 = vpop.f32.mrf.mxu0
      %v1262 = vadd.f32 %v1093, %v1261
      %v1263 = vpop.f32.mrf.mxu0
      %v1264 = vadd.f32 %v1095, %v1263
      %1265 = vmatmul.bf16.gmra.mxu0 %v924
      %v1266 = vpop.f32.mrf.mxu0
      %v1267 = vadd.f32 %v1098, %v1266
      %v1268 = vpop.f32.mrf.mxu0
      %v1269 = vadd.f32 %v1100, %v1268
      %1270 = vdwg.mxu0
      %v1271 = vadd.f32 %v337, %v1112
      %v1272 = vadd.f32 %v338, %v1114
      %v1273 = vadd.f32 %v339, %v1117
      %v1274 = vadd.f32 %v340, %v1119
      %v1275 = vadd.f32 %v341, %v1122
      %v1276 = vadd.f32 %v342, %v1124
      %v1277 = vadd.f32 %v343, %v1127
      %v1278 = vadd.f32 %v344, %v1129
      %v1279 = vadd.f32 %v345, %v1132
      %v1280 = vadd.f32 %v346, %v1134
      %v1281 = vadd.f32 %v347, %v1137
      %v1282 = vadd.f32 %v348, %v1139
      %v1283 = vadd.f32 %v349, %v1142
      %v1284 = vadd.f32 %v350, %v1144
      %v1285 = vadd.f32 %v351, %v1147
      %v1286 = vadd.f32 %v352, %v1149
      %v1287 = vadd.f32 %v353, %v1152
      %v1288 = vadd.f32 %v354, %v1154
      %v1289 = vadd.f32 %v355, %v1157
      %v1290 = vadd.f32 %v356, %v1159
      %v1291 = vadd.f32 %v357, %v1162
      %v1292 = vadd.f32 %v358, %v1164
      %v1293 = vadd.f32 %v359, %v1167
      %v1294 = vadd.f32 %v360, %v1169
      %v1295 = vadd.f32 %v361, %v1172
      %v1296 = vadd.f32 %v362, %v1174
      %v1297 = vadd.f32 %v363, %v1177
      %v1298 = vadd.f32 %v364, %v1179
      %v1299 = vadd.f32 %v365, %v1182
      %v1300 = vadd.f32 %v366, %v1184
      %v1301 = vadd.f32 %v367, %v1187
      %v1302 = vadd.f32 %v368, %v1189
      %v1303 = vadd.f32 %v369, %v1192
      %v1304 = vadd.f32 %v370, %v1194
      %v1305 = vadd.f32 %v371, %v1197
      %v1306 = vadd.f32 %v372, %v1199
      %v1307 = vadd.f32 %v373, %v1202
      %v1308 = vadd.f32 %v374, %v1204
      %v1309 = vadd.f32 %v375, %v1207
      %v1310 = vadd.f32 %v376, %v1209
      %v1311 = vadd.f32 %v377, %v1212
      %v1312 = vadd.f32 %v378, %v1214
      %v1313 = vadd.f32 %v379, %v1217
      %v1314 = vadd.f32 %v380, %v1219
      %v1315 = vadd.f32 %v381, %v1222
      %v1316 = vadd.f32 %v382, %v1224
      %v1317 = vadd.f32 %v383, %v1227
      %v1318 = vadd.f32 %v384, %v1229
      %v1319 = vadd.f32 %v385, %v1232
      %v1320 = vadd.f32 %v386, %v1234
      %v1321 = vadd.f32 %v387, %v1237
      %v1322 = vadd.f32 %v388, %v1239
      %v1323 = vadd.f32 %v389, %v1242
      %v1324 = vadd.f32 %v390, %v1244
      %v1325 = vadd.f32 %v391, %v1247
      %v1326 = vadd.f32 %v392, %v1249
      %v1327 = vadd.f32 %v393, %v1252
      %v1328 = vadd.f32 %v394, %v1254
      %v1329 = vadd.f32 %v395, %v1257
      %v1330 = vadd.f32 %v396, %v1259
      %v1331 = vadd.f32 %v397, %v1262
      %v1332 = vadd.f32 %v398, %v1264
      %v1333 = vadd.f32 %v399, %v1267
      %v1334 = vadd.f32 %v400, %v1269
      %vm1335 = vcmask 64512
      %1336 = vst.msk [vmem:[#allocation2] sm:$0xff] %vm1335, %v1271
      %1337 = vst.msk [vmem:[#allocation2 + $0x8] sm:$0xff] %vm1335, %v1272
      %1338 = vst.msk [vmem:[#allocation2 + $0x10] sm:$0xff] %vm1335, %v1273
      %1339 = vst.msk [vmem:[#allocation2 + $0x18] sm:$0xff] %vm1335, %v1274
      %1340 = vst.msk [vmem:[#allocation2 + $0x20] sm:$0xff] %vm1335, %v1275
      %1341 = vst.msk [vmem:[#allocation2 + $0x28] sm:$0xff] %vm1335, %v1276
      %1342 = vst.msk [vmem:[#allocation2 + $0x30] sm:$0xff] %vm1335, %v1277
      %1343 = vst.msk [vmem:[#allocation2 + $0x38] sm:$0xff] %vm1335, %v1278
      %1344 = vst.msk [vmem:[#allocation2 + $0x40] sm:$0xff] %vm1335, %v1279
      %1345 = vst.msk [vmem:[#allocation2 + $0x48] sm:$0xff] %vm1335, %v1280
      %1346 = vst.msk [vmem:[#allocation2 + $0x50] sm:$0xff] %vm1335, %v1281
      %1347 = vst.msk [vmem:[#allocation2 + $0x58] sm:$0xff] %vm1335, %v1282
      %1348 = vst.msk [vmem:[#allocation2 + $0x60] sm:$0xff] %vm1335, %v1283
      %1349 = vst.msk [vmem:[#allocation2 + $0x68] sm:$0xff] %vm1335, %v1284
      %1350 = vst.msk [vmem:[#allocation2 + $0x70] sm:$0xff] %vm1335, %v1285
      %1351 = vst.msk [vmem:[#allocation2 + $0x78] sm:$0xff] %vm1335, %v1286
      %1352 = vst.msk [vmem:[#allocation2 + $0x80] sm:$0xff] %vm1335, %v1287
      %1353 = vst.msk [vmem:[#allocation2 + $0x88] sm:$0xff] %vm1335, %v1288
      %1354 = vst.msk [vmem:[#allocation2 + $0x90] sm:$0xff] %vm1335, %v1289
      %1355 = vst.msk [vmem:[#allocation2 + $0x98] sm:$0xff] %vm1335, %v1290
      %1356 = vst.msk [vmem:[#allocation2 + $0xa0] sm:$0xff] %vm1335, %v1291
      %1357 = vst.msk [vmem:[#allocation2 + $0xa8] sm:$0xff] %vm1335, %v1292
      %1358 = vst.msk [vmem:[#allocation2 + $0xb0] sm:$0xff] %vm1335, %v1293
      %1359 = vst.msk [vmem:[#allocation2 + $0xb8] sm:$0xff] %vm1335, %v1294
      %1360 = vst.msk [vmem:[#allocation2 + $0xc0] sm:$0xff] %vm1335, %v1295
      %1361 = vst.msk [vmem:[#allocation2 + $0xc8] sm:$0xff] %vm1335, %v1296
      %1362 = vst.msk [vmem:[#allocation2 + $0xd0] sm:$0xff] %vm1335, %v1297
      %1363 = vst.msk [vmem:[#allocation2 + $0xd8] sm:$0xff] %vm1335, %v1298
      %1364 = vst.msk [vmem:[#allocation2 + $0xe0] sm:$0xff] %vm1335, %v1299
      %1365 = vst.msk [vmem:[#allocation2 + $0xe8] sm:$0xff] %vm1335, %v1300
      %1366 = vst.msk [vmem:[#allocation2 + $0xf0] sm:$0xff] %vm1335, %v1301
      %1367 = vst.msk [vmem:[#allocation2 + $0xf8] sm:$0xff] %vm1335, %v1302
      %1368 = vst.msk [vmem:[#allocation2 + $0x100] sm:$0xff] %vm1335, %v1303
      %1369 = vst.msk [vmem:[#allocation2 + $0x108] sm:$0xff] %vm1335, %v1304
      %1370 = vst.msk [vmem:[#allocation2 + $0x110] sm:$0xff] %vm1335, %v1305
      %1371 = vst.msk [vmem:[#allocation2 + $0x118] sm:$0xff] %vm1335, %v1306
      %1372 = vst.msk [vmem:[#allocation2 + $0x120] sm:$0xff] %vm1335, %v1307
      %1373 = vst.msk [vmem:[#allocation2 + $0x128] sm:$0xff] %vm1335, %v1308
      %1374 = vst.msk [vmem:[#allocation2 + $0x130] sm:$0xff] %vm1335, %v1309
      %1375 = vst.msk [vmem:[#allocation2 + $0x138] sm:$0xff] %vm1335, %v1310
      %1376 = vst.msk [vmem:[#allocation2 + $0x140] sm:$0xff] %vm1335, %v1311
      %1377 = vst.msk [vmem:[#allocation2 + $0x148] sm:$0xff] %vm1335, %v1312
      %1378 = vst.msk [vmem:[#allocation2 + $0x150] sm:$0xff] %vm1335, %v1313
      %1379 = vst.msk [vmem:[#allocation2 + $0x158] sm:$0xff] %vm1335, %v1314
      %1380 = vst.msk [vmem:[#allocation2 + $0x160] sm:$0xff] %vm1335, %v1315
      %1381 = vst.msk [vmem:[#allocation2 + $0x168] sm:$0xff] %vm1335, %v1316
      %1382 = vst.msk [vmem:[#allocation2 + $0x170] sm:$0xff] %vm1335, %v1317
      %1383 = vst.msk [vmem:[#allocation2 + $0x178] sm:$0xff] %vm1335, %v1318
      %1384 = vst.msk [vmem:[#allocation2 + $0x180] sm:$0xff] %vm1335, %v1319
      %1385 = vst.msk [vmem:[#allocation2 + $0x188] sm:$0xff] %vm1335, %v1320
      %1386 = vst.msk [vmem:[#allocation2 + $0x190] sm:$0xff] %vm1335, %v1321
      %1387 = vst.msk [vmem:[#allocation2 + $0x198] sm:$0xff] %vm1335, %v1322
      %1388 = vst.msk [vmem:[#allocation2 + $0x1a0] sm:$0xff] %vm1335, %v1323
      %1389 = vst.msk [vmem:[#allocation2 + $0x1a8] sm:$0xff] %vm1335, %v1324
      %1390 = vst.msk [vmem:[#allocation2 + $0x1b0] sm:$0xff] %vm1335, %v1325
      %1391 = vst.msk [vmem:[#allocation2 + $0x1b8] sm:$0xff] %vm1335, %v1326
      %1392 = vst.msk [vmem:[#allocation2 + $0x1c0] sm:$0xff] %vm1335, %v1327
      %1393 = vst.msk [vmem:[#allocation2 + $0x1c8] sm:$0xff] %vm1335, %v1328
      %1394 = vst.msk [vmem:[#allocation2 + $0x1d0] sm:$0xff] %vm1335, %v1329
      %1395 = vst.msk [vmem:[#allocation2 + $0x1d8] sm:$0xff] %vm1335, %v1330
      %1396 = vst.msk [vmem:[#allocation2 + $0x1e0] sm:$0xff] %vm1335, %v1331
      %1397 = vst.msk [vmem:[#allocation2 + $0x1e8] sm:$0xff] %vm1335, %v1332
      %1398 = vst.msk [vmem:[#allocation2 + $0x1f0] sm:$0xff] %vm1335, %v1333
      %1399 = vst.msk [vmem:[#allocation2 + $0x1f8] sm:$0xff] %vm1335, %v1334
      // Predicated region
      $region37: #{tpu_custom_call.1} parent=31 // pred_check
        %p1400 = pneg %p268
      $region38: #{tpu_custom_call.1} parent=31 // pred_check_branch
        %1402 = sbr.rel (%p1400) target = $region40
      $region39: #{tpu_custom_call.1} parent=31 // pred_region
        %v1403 = vld [vmem:[#allocation2] sm:$0xff]
        %v1404 = vld [vmem:[#allocation2 + $0x8] sm:$0xff]
        %v1405 = vld [vmem:[#allocation2 + $0x10] sm:$0xff]
        %v1406 = vld [vmem:[#allocation2 + $0x18] sm:$0xff]
        %v1407 = vld [vmem:[#allocation2 + $0x20] sm:$0xff]
        %v1408 = vld [vmem:[#allocation2 + $0x28] sm:$0xff]
        %v1409 = vld [vmem:[#allocation2 + $0x30] sm:$0xff]
        %v1410 = vld [vmem:[#allocation2 + $0x38] sm:$0xff]
        %v1411 = vld [vmem:[#allocation2 + $0x40] sm:$0xff]
        %v1412 = vld [vmem:[#allocation2 + $0x48] sm:$0xff]
        %v1413 = vld [vmem:[#allocation2 + $0x50] sm:$0xff]
        %v1414 = vld [vmem:[#allocation2 + $0x58] sm:$0xff]
        %v1415 = vld [vmem:[#allocation2 + $0x60] sm:$0xff]
        %v1416 = vld [vmem:[#allocation2 + $0x68] sm:$0xff]
        %v1417 = vld [vmem:[#allocation2 + $0x70] sm:$0xff]
        %v1418 = vld [vmem:[#allocation2 + $0x78] sm:$0xff]
        %v1419 = vld [vmem:[#allocation2 + $0x80] sm:$0xff]
        %v1420 = vld [vmem:[#allocation2 + $0x88] sm:$0xff]
        %v1421 = vld [vmem:[#allocation2 + $0x90] sm:$0xff]
        %v1422 = vld [vmem:[#allocation2 + $0x98] sm:$0xff]
        %v1423 = vld [vmem:[#allocation2 + $0xa0] sm:$0xff]
        %v1424 = vld [vmem:[#allocation2 + $0xa8] sm:$0xff]
        %v1425 = vld [vmem:[#allocation2 + $0xb0] sm:$0xff]
        %v1426 = vld [vmem:[#allocation2 + $0xb8] sm:$0xff]
        %v1427 = vld [vmem:[#allocation2 + $0xc0] sm:$0xff]
        %v1428 = vld [vmem:[#allocation2 + $0xc8] sm:$0xff]
        %v1429 = vld [vmem:[#allocation2 + $0xd0] sm:$0xff]
        %v1430 = vld [vmem:[#allocation2 + $0xd8] sm:$0xff]
        %v1431 = vld [vmem:[#allocation2 + $0xe0] sm:$0xff]
        %v1432 = vld [vmem:[#allocation2 + $0xe8] sm:$0xff]
        %v1433 = vld [vmem:[#allocation2 + $0xf0] sm:$0xff]
        %v1434 = vld [vmem:[#allocation2 + $0xf8] sm:$0xff]
        %v1435 = vld [vmem:[#allocation2 + $0x100] sm:$0xff]
        %v1436 = vld [vmem:[#allocation2 + $0x108] sm:$0xff]
        %v1437 = vld [vmem:[#allocation2 + $0x110] sm:$0xff]
        %v1438 = vld [vmem:[#allocation2 + $0x118] sm:$0xff]
        %v1439 = vld [vmem:[#allocation2 + $0x120] sm:$0xff]
        %v1440 = vld [vmem:[#allocation2 + $0x128] sm:$0xff]
        %v1441 = vld [vmem:[#allocation2 + $0x130] sm:$0xff]
        %v1442 = vld [vmem:[#allocation2 + $0x138] sm:$0xff]
        %v1443 = vld [vmem:[#allocation2 + $0x140] sm:$0xff]
        %v1444 = vld [vmem:[#allocation2 + $0x148] sm:$0xff]
        %v1445 = vld [vmem:[#allocation2 + $0x150] sm:$0xff]
        %v1446 = vld [vmem:[#allocation2 + $0x158] sm:$0xff]
        %v1447 = vld [vmem:[#allocation2 + $0x160] sm:$0xff]
        %v1448 = vld [vmem:[#allocation2 + $0x168] sm:$0xff]
        %v1449 = vld [vmem:[#allocation2 + $0x170] sm:$0xff]
        %v1450 = vld [vmem:[#allocation2 + $0x178] sm:$0xff]
        %v1451 = vld [vmem:[#allocation2 + $0x180] sm:$0xff]
        %v1452 = vld [vmem:[#allocation2 + $0x188] sm:$0xff]
        %v1453 = vld [vmem:[#allocation2 + $0x190] sm:$0xff]
        %v1454 = vld [vmem:[#allocation2 + $0x198] sm:$0xff]
        %v1455 = vld [vmem:[#allocation2 + $0x1a0] sm:$0xff]
        %v1456 = vld [vmem:[#allocation2 + $0x1a8] sm:$0xff]
        %v1457 = vld [vmem:[#allocation2 + $0x1b0] sm:$0xff]
        %v1458 = vld [vmem:[#allocation2 + $0x1b8] sm:$0xff]
        %v1459 = vld [vmem:[#allocation2 + $0x1c0] sm:$0xff]
        %v1460 = vld [vmem:[#allocation2 + $0x1c8] sm:$0xff]
        %v1461 = vld [vmem:[#allocation2 + $0x1d0] sm:$0xff]
        %v1462 = vld [vmem:[#allocation2 + $0x1d8] sm:$0xff]
        %v1463 = vld [vmem:[#allocation2 + $0x1e0] sm:$0xff]
        %v1464 = vld [vmem:[#allocation2 + $0x1e8] sm:$0xff]
        %v1465 = vld [vmem:[#allocation2 + $0x1f0] sm:$0xff]
        %v1466 = vld [vmem:[#allocation2 + $0x1f8] sm:$0xff]
        %v1467 = vld [vmem:[%s257] sm:$0x1]
        %v1469 = vperm.slane %v1467, 0
        %v1471 = vadd.f32 %v1403, %v1469
        %v1472 = vadd.f32 %v1404, %v1469
        %v1473 = vadd.f32 %v1405, %v1469
        %v1474 = vadd.f32 %v1406, %v1469
        %v1475 = vadd.f32 %v1407, %v1469
        %v1476 = vadd.f32 %v1408, %v1469
        %v1477 = vadd.f32 %v1409, %v1469
        %v1478 = vadd.f32 %v1410, %v1469
        %v1479 = vadd.f32 %v1411, %v1469
        %v1480 = vadd.f32 %v1412, %v1469
        %v1481 = vadd.f32 %v1413, %v1469
        %v1482 = vadd.f32 %v1414, %v1469
        %v1483 = vadd.f32 %v1415, %v1469
        %v1484 = vadd.f32 %v1416, %v1469
        %v1485 = vadd.f32 %v1417, %v1469
        %v1486 = vadd.f32 %v1418, %v1469
        %v1487 = vadd.f32 %v1419, %v1469
        %v1488 = vadd.f32 %v1420, %v1469
        %v1489 = vadd.f32 %v1421, %v1469
        %v1490 = vadd.f32 %v1422, %v1469
        %v1491 = vadd.f32 %v1423, %v1469
        %v1492 = vadd.f32 %v1424, %v1469
        %v1493 = vadd.f32 %v1425, %v1469
        %v1494 = vadd.f32 %v1426, %v1469
        %v1495 = vadd.f32 %v1427, %v1469
        %v1496 = vadd.f32 %v1428, %v1469
        %v1497 = vadd.f32 %v1429, %v1469
        %v1498 = vadd.f32 %v1430, %v1469
        %v1499 = vadd.f32 %v1431, %v1469
        %v1500 = vadd.f32 %v1432, %v1469
        %v1501 = vadd.f32 %v1433, %v1469
        %v1502 = vadd.f32 %v1434, %v1469
        %v1503 = vadd.f32 %v1435, %v1469
        %v1504 = vadd.f32 %v1436, %v1469
        %v1505 = vadd.f32 %v1437, %v1469
        %v1506 = vadd.f32 %v1438, %v1469
        %v1507 = vadd.f32 %v1439, %v1469
        %v1508 = vadd.f32 %v1440, %v1469
        %v1509 = vadd.f32 %v1441, %v1469
        %v1510 = vadd.f32 %v1442, %v1469
        %v1511 = vadd.f32 %v1443, %v1469
        %v1512 = vadd.f32 %v1444, %v1469
        %v1513 = vadd.f32 %v1445, %v1469
        %v1514 = vadd.f32 %v1446, %v1469
        %v1515 = vadd.f32 %v1447, %v1469
        %v1516 = vadd.f32 %v1448, %v1469
        %v1517 = vadd.f32 %v1449, %v1469
        %v1518 = vadd.f32 %v1450, %v1469
        %v1519 = vadd.f32 %v1451, %v1469
        %v1520 = vadd.f32 %v1452, %v1469
        %v1521 = vadd.f32 %v1453, %v1469
        %v1522 = vadd.f32 %v1454, %v1469
        %v1523 = vadd.f32 %v1455, %v1469
        %v1524 = vadd.f32 %v1456, %v1469
        %v1525 = vadd.f32 %v1457, %v1469
        %v1526 = vadd.f32 %v1458, %v1469
        %v1527 = vadd.f32 %v1459, %v1469
        %v1528 = vadd.f32 %v1460, %v1469
        %v1529 = vadd.f32 %v1461, %v1469
        %v1530 = vadd.f32 %v1462, %v1469
        %v1531 = vadd.f32 %v1463, %v1469
        %v1532 = vadd.f32 %v1464, %v1469
        %v1533 = vadd.f32 %v1465, %v1469
        %v1534 = vadd.f32 %v1466, %v1469
        %v1535 = vmax.f32 %v1471, 0.0
        %v1536 = vmax.f32 %v1472, 0.0
        %v1537 = vmax.f32 %v1473, 0.0
        %v1538 = vmax.f32 %v1474, 0.0
        %v1539 = vmax.f32 %v1475, 0.0
        %v1540 = vmax.f32 %v1476, 0.0
        %v1541 = vmax.f32 %v1477, 0.0
        %v1542 = vmax.f32 %v1478, 0.0
        %v1543 = vmax.f32 %v1479, 0.0
        %v1544 = vmax.f32 %v1480, 0.0
        %v1545 = vmax.f32 %v1481, 0.0
        %v1546 = vmax.f32 %v1482, 0.0
        %v1547 = vmax.f32 %v1483, 0.0
        %v1548 = vmax.f32 %v1484, 0.0
        %v1549 = vmax.f32 %v1485, 0.0
        %v1550 = vmax.f32 %v1486, 0.0
        %v1551 = vmax.f32 %v1487, 0.0
        %v1552 = vmax.f32 %v1488, 0.0
        %v1553 = vmax.f32 %v1489, 0.0
        %v1554 = vmax.f32 %v1490, 0.0
        %v1555 = vmax.f32 %v1491, 0.0
        %v1556 = vmax.f32 %v1492, 0.0
        %v1557 = vmax.f32 %v1493, 0.0
        %v1558 = vmax.f32 %v1494, 0.0
        %v1559 = vmax.f32 %v1495, 0.0
        %v1560 = vmax.f32 %v1496, 0.0
        %v1561 = vmax.f32 %v1497, 0.0
        %v1562 = vmax.f32 %v1498, 0.0
        %v1563 = vmax.f32 %v1499, 0.0
        %v1564 = vmax.f32 %v1500, 0.0
        %v1565 = vmax.f32 %v1501, 0.0
        %v1566 = vmax.f32 %v1502, 0.0
        %v1567 = vmax.f32 %v1503, 0.0
        %v1568 = vmax.f32 %v1504, 0.0
        %v1569 = vmax.f32 %v1505, 0.0
        %v1570 = vmax.f32 %v1506, 0.0
        %v1571 = vmax.f32 %v1507, 0.0
        %v1572 = vmax.f32 %v1508, 0.0
        %v1573 = vmax.f32 %v1509, 0.0
        %v1574 = vmax.f32 %v1510, 0.0
        %v1575 = vmax.f32 %v1511, 0.0
        %v1576 = vmax.f32 %v1512, 0.0
        %v1577 = vmax.f32 %v1513, 0.0
        %v1578 = vmax.f32 %v1514, 0.0
        %v1579 = vmax.f32 %v1515, 0.0
        %v1580 = vmax.f32 %v1516, 0.0
        %v1581 = vmax.f32 %v1517, 0.0
        %v1582 = vmax.f32 %v1518, 0.0
        %v1583 = vmax.f32 %v1519, 0.0
        %v1584 = vmax.f32 %v1520, 0.0
        %v1585 = vmax.f32 %v1521, 0.0
        %v1586 = vmax.f32 %v1522, 0.0
        %v1587 = vmax.f32 %v1523, 0.0
        %v1588 = vmax.f32 %v1524, 0.0
        %v1589 = vmax.f32 %v1525, 0.0
        %v1590 = vmax.f32 %v1526, 0.0
        %v1591 = vmax.f32 %v1527, 0.0
        %v1592 = vmax.f32 %v1528, 0.0
        %v1593 = vmax.f32 %v1529, 0.0
        %v1594 = vmax.f32 %v1530, 0.0
        %v1595 = vmax.f32 %v1531, 0.0
        %v1596 = vmax.f32 %v1532, 0.0
        %v1597 = vmax.f32 %v1533, 0.0
        %v1598 = vmax.f32 %v1534, 0.0
        %v1599 = vpack.c.bf16 %v1535, %v1535
        %v1600 = vpack.c.bf16 %v1536, %v1536
        %v1601 = vpack.c.bf16 %v1537, %v1537
        %v1602 = vpack.c.bf16 %v1538, %v1538
        %v1603 = vpack.c.bf16 %v1539, %v1539
        %v1604 = vpack.c.bf16 %v1540, %v1540
        %v1605 = vpack.c.bf16 %v1541, %v1541
        %v1606 = vpack.c.bf16 %v1542, %v1542
        %v1607 = vpack.c.bf16 %v1543, %v1543
        %v1608 = vpack.c.bf16 %v1544, %v1544
        %v1609 = vpack.c.bf16 %v1545, %v1545
        %v1610 = vpack.c.bf16 %v1546, %v1546
        %v1611 = vpack.c.bf16 %v1547, %v1547
        %v1612 = vpack.c.bf16 %v1548, %v1548
        %v1613 = vpack.c.bf16 %v1549, %v1549
        %v1614 = vpack.c.bf16 %v1550, %v1550
        %v1615 = vpack.c.bf16 %v1551, %v1551
        %v1616 = vpack.c.bf16 %v1552, %v1552
        %v1617 = vpack.c.bf16 %v1553, %v1553
        %v1618 = vpack.c.bf16 %v1554, %v1554
        %v1619 = vpack.c.bf16 %v1555, %v1555
        %v1620 = vpack.c.bf16 %v1556, %v1556
        %v1621 = vpack.c.bf16 %v1557, %v1557
        %v1622 = vpack.c.bf16 %v1558, %v1558
        %v1623 = vpack.c.bf16 %v1559, %v1559
        %v1624 = vpack.c.bf16 %v1560, %v1560
        %v1625 = vpack.c.bf16 %v1561, %v1561
        %v1626 = vpack.c.bf16 %v1562, %v1562
        %v1627 = vpack.c.bf16 %v1563, %v1563
        %v1628 = vpack.c.bf16 %v1564, %v1564
        %v1629 = vpack.c.bf16 %v1565, %v1565
        %v1630 = vpack.c.bf16 %v1566, %v1566
        %v1631 = vpack.c.bf16 %v1567, %v1567
        %v1632 = vpack.c.bf16 %v1568, %v1568
        %v1633 = vpack.c.bf16 %v1569, %v1569
        %v1634 = vpack.c.bf16 %v1570, %v1570
        %v1635 = vpack.c.bf16 %v1571, %v1571
        %v1636 = vpack.c.bf16 %v1572, %v1572
        %v1637 = vpack.c.bf16 %v1573, %v1573
        %v1638 = vpack.c.bf16 %v1574, %v1574
        %v1639 = vpack.c.bf16 %v1575, %v1575
        %v1640 = vpack.c.bf16 %v1576, %v1576
        %v1641 = vpack.c.bf16 %v1577, %v1577
        %v1642 = vpack.c.bf16 %v1578, %v1578
        %v1643 = vpack.c.bf16 %v1579, %v1579
        %v1644 = vpack.c.bf16 %v1580, %v1580
        %v1645 = vpack.c.bf16 %v1581, %v1581
        %v1646 = vpack.c.bf16 %v1582, %v1582
        %v1647 = vpack.c.bf16 %v1583, %v1583
        %v1648 = vpack.c.bf16 %v1584, %v1584
        %v1649 = vpack.c.bf16 %v1585, %v1585
        %v1650 = vpack.c.bf16 %v1586, %v1586
        %v1651 = vpack.c.bf16 %v1587, %v1587
        %v1652 = vpack.c.bf16 %v1588, %v1588
        %v1653 = vpack.c.bf16 %v1589, %v1589
        %v1654 = vpack.c.bf16 %v1590, %v1590
        %v1655 = vpack.c.bf16 %v1591, %v1591
        %v1656 = vpack.c.bf16 %v1592, %v1592
        %v1657 = vpack.c.bf16 %v1593, %v1593
        %v1658 = vpack.c.bf16 %v1594, %v1594
        %v1659 = vpack.c.bf16 %v1595, %v1595
        %v1660 = vpack.c.bf16 %v1596, %v1596
        %v1661 = vpack.c.bf16 %v1597, %v1597
        %v1662 = vpack.c.bf16 %v1598, %v1598
        %vm1663 = vcmask 60416
        %1664 = vst.msk [vmem:[%s265] sm:$0xf] %vm1663, %v1599
        %1665 = vst.msk [vmem:[%s265 + $0x4] sm:$0xf] %vm1663, %v1600
        %1666 = vst.msk [vmem:[%s265 + $0x8] sm:$0xf] %vm1663, %v1601
        %1667 = vst.msk [vmem:[%s265 + $0xc] sm:$0xf] %vm1663, %v1602
        %1668 = vst.msk [vmem:[%s265 + $0x10] sm:$0xf] %vm1663, %v1603
        %1669 = vst.msk [vmem:[%s265 + $0x14] sm:$0xf] %vm1663, %v1604
        %1670 = vst.msk [vmem:[%s265 + $0x18] sm:$0xf] %vm1663, %v1605
        %1671 = vst.msk [vmem:[%s265 + $0x1c] sm:$0xf] %vm1663, %v1606
        %1672 = vst.msk [vmem:[%s265 + $0x20] sm:$0xf] %vm1663, %v1607
        %1673 = vst.msk [vmem:[%s265 + $0x24] sm:$0xf] %vm1663, %v1608
        %1674 = vst.msk [vmem:[%s265 + $0x28] sm:$0xf] %vm1663, %v1609
        %1675 = vst.msk [vmem:[%s265 + $0x2c] sm:$0xf] %vm1663, %v1610
        %1676 = vst.msk [vmem:[%s265 + $0x30] sm:$0xf] %vm1663, %v1611
        %1677 = vst.msk [vmem:[%s265 + $0x34] sm:$0xf] %vm1663, %v1612
        %1678 = vst.msk [vmem:[%s265 + $0x38] sm:$0xf] %vm1663, %v1613
        %1679 = vst.msk [vmem:[%s265 + $0x3c] sm:$0xf] %vm1663, %v1614
        %1680 = vst.msk [vmem:[%s265 + $0x40] sm:$0xf] %vm1663, %v1615
        %1681 = vst.msk [vmem:[%s265 + $0x44] sm:$0xf] %vm1663, %v1616
        %1682 = vst.msk [vmem:[%s265 + $0x48] sm:$0xf] %vm1663, %v1617
        %1683 = vst.msk [vmem:[%s265 + $0x4c] sm:$0xf] %vm1663, %v1618
        %1684 = vst.msk [vmem:[%s265 + $0x50] sm:$0xf] %vm1663, %v1619
        %1685 = vst.msk [vmem:[%s265 + $0x54] sm:$0xf] %vm1663, %v1620
        %1686 = vst.msk [vmem:[%s265 + $0x58] sm:$0xf] %vm1663, %v1621
        %1687 = vst.msk [vmem:[%s265 + $0x5c] sm:$0xf] %vm1663, %v1622
        %1688 = vst.msk [vmem:[%s265 + $0x60] sm:$0xf] %vm1663, %v1623
        %1689 = vst.msk [vmem:[%s265 + $0x64] sm:$0xf] %vm1663, %v1624
        %1690 = vst.msk [vmem:[%s265 + $0x68] sm:$0xf] %vm1663, %v1625
        %1691 = vst.msk [vmem:[%s265 + $0x6c] sm:$0xf] %vm1663, %v1626
        %1692 = vst.msk [vmem:[%s265 + $0x70] sm:$0xf] %vm1663, %v1627
        %1693 = vst.msk [vmem:[%s265 + $0x74] sm:$0xf] %vm1663, %v1628
        %1694 = vst.msk [vmem:[%s265 + $0x78] sm:$0xf] %vm1663, %v1629
        %1695 = vst.msk [vmem:[%s265 + $0x7c] sm:$0xf] %vm1663, %v1630
        %1696 = vst.msk [vmem:[%s265 + $0x80] sm:$0xf] %vm1663, %v1631
        %1697 = vst.msk [vmem:[%s265 + $0x84] sm:$0xf] %vm1663, %v1632
        %1698 = vst.msk [vmem:[%s265 + $0x88] sm:$0xf] %vm1663, %v1633
        %1699 = vst.msk [vmem:[%s265 + $0x8c] sm:$0xf] %vm1663, %v1634
        %1700 = vst.msk [vmem:[%s265 + $0x90] sm:$0xf] %vm1663, %v1635
        %1701 = vst.msk [vmem:[%s265 + $0x94] sm:$0xf] %vm1663, %v1636
        %1702 = vst.msk [vmem:[%s265 + $0x98] sm:$0xf] %vm1663, %v1637
        %1703 = vst.msk [vmem:[%s265 + $0x9c] sm:$0xf] %vm1663, %v1638
        %1704 = vst.msk [vmem:[%s265 + $0xa0] sm:$0xf] %vm1663, %v1639
        %1705 = vst.msk [vmem:[%s265 + $0xa4] sm:$0xf] %vm1663, %v1640
        %1706 = vst.msk [vmem:[%s265 + $0xa8] sm:$0xf] %vm1663, %v1641
        %1707 = vst.msk [vmem:[%s265 + $0xac] sm:$0xf] %vm1663, %v1642
        %1708 = vst.msk [vmem:[%s265 + $0xb0] sm:$0xf] %vm1663, %v1643
        %1709 = vst.msk [vmem:[%s265 + $0xb4] sm:$0xf] %vm1663, %v1644
        %1710 = vst.msk [vmem:[%s265 + $0xb8] sm:$0xf] %vm1663, %v1645
        %1711 = vst.msk [vmem:[%s265 + $0xbc] sm:$0xf] %vm1663, %v1646
        %1712 = vst.msk [vmem:[%s265 + $0xc0] sm:$0xf] %vm1663, %v1647
        %1713 = vst.msk [vmem:[%s265 + $0xc4] sm:$0xf] %vm1663, %v1648
        %1714 = vst.msk [vmem:[%s265 + $0xc8] sm:$0xf] %vm1663, %v1649
        %1715 = vst.msk [vmem:[%s265 + $0xcc] sm:$0xf] %vm1663, %v1650
        %1716 = vst.msk [vmem:[%s265 + $0xd0] sm:$0xf] %vm1663, %v1651
        %1717 = vst.msk [vmem:[%s265 + $0xd4] sm:$0xf] %vm1663, %v1652
        %1718 = vst.msk [vmem:[%s265 + $0xd8] sm:$0xf] %vm1663, %v1653
        %1719 = vst.msk [vmem:[%s265 + $0xdc] sm:$0xf] %vm1663, %v1654
        %1720 = vst.msk [vmem:[%s265 + $0xe0] sm:$0xf] %vm1663, %v1655
        %1721 = vst.msk [vmem:[%s265 + $0xe4] sm:$0xf] %vm1663, %v1656
        %1722 = vst.msk [vmem:[%s265 + $0xe8] sm:$0xf] %vm1663, %v1657
        %1723 = vst.msk [vmem:[%s265 + $0xec] sm:$0xf] %vm1663, %v1658
        %1724 = vst.msk [vmem:[%s265 + $0xf0] sm:$0xf] %vm1663, %v1659
        %1725 = vst.msk [vmem:[%s265 + $0xf4] sm:$0xf] %vm1663, %v1660
        %1726 = vst.msk [vmem:[%s265 + $0xf8] sm:$0xf] %vm1663, %v1661
        %1727 = vst.msk [vmem:[%s265 + $0xfc] sm:$0xf] %vm1663, %v1662
      $region40: #{tpu_custom_call.1} parent=31 // pred_fallthru
        _
      %s1728 = smul.u32 64, %s19
      %p1729 = scmp.lt.s32.totalorder %s1728, 127
      %s1730 = scalar_select %p1729, %s1728, 127
      %p1731 = scmp.lt.s32.totalorder %s20, 0
      %s1732 = scalar_select %p1731, %s20, 0
      %s1733 = sadd.s32 %s1732, %s1730
      %s1734 = smul.addr %s1733, 4
      %s1735 = scalar_lea.vmem %s3, %s1734
      // Predicated region
      $region41: #{tpu_custom_call.1} parent=31 // pred_check
        %p1736 = pneg %p135
      $region42: #{tpu_custom_call.1} parent=31 // pred_check_branch
        %1738 = sbr.rel (%p1736) target = $region44
      $region43: #{tpu_custom_call.1} parent=31 // pred_region
        %s1739 = smul.u32 64, %s19
      $region44: #{tpu_custom_call.1} parent=31 // pred_fallthru
        _
    $region32: #{tpu_custom_call.1} parent=5 // pred_fallthru
      _
    %p1740 = scmp.le.s32.totalorder 2, %s9
    // Predicated region
    $region45: #{tpu_custom_call.1} parent=5 // pred_check
      %p1741 = pneg %p1740
    $region46: #{tpu_custom_call.1} parent=5 // pred_check_branch
      %1743 = sbr.rel (%p1741) target = $region48
    $region47: #{tpu_custom_call.1} parent=5 // pred_region
      %s1744 = ssub.s32 %s9, 2
      // Predicated region
      $region49: #{tpu_custom_call.1} parent=47 // pred_check
        %p1745 = pneg %p141
      $region50: #{tpu_custom_call.1} parent=47 // pred_check_branch
        %1747 = sbr.rel (%p1745) target = $region52
      $region51: #{tpu_custom_call.1} parent=47 // pred_region
        %s1748 = smul.u32 64, %s22
        %p1749 = scmp.lt.s32.totalorder %s1748, 127
        %s1750 = scalar_select %p1749, %s1748, 127
        %p1751 = scmp.lt.s32.totalorder %s23, 0
        %s1752 = scalar_select %p1751, %s23, 0
        %s1753 = sadd.s32 %s1752, %s1750
        %s1754 = smul.addr %s1753, 4
        %s1755 = scalar_lea.vmem %s3, %s1754
      $region52: #{tpu_custom_call.1} parent=47 // pred_fallthru
        _
    $region48: #{tpu_custom_call.1} parent=5 // pred_fallthru
      _
  $region6: #{tpu_custom_call.1} parent=0 // loop_footer
    %s13 = sadd.s32 1, %s9
  $region7: #{tpu_custom_call.1} parent=0 // loop_footer_branch
    %8 = sbr.rel target = $region3
  $region8: #{tpu_custom_call.1} parent=0 // loop_exit
    _

</llo_original>
